<compile_context>
chip_gen: v6e
topology: v6e:2x2x1
jax: 0.10.0
libtpu: 0.0.40
codegen_flags: <defaults>
</compile_context>

<pallas_src>
import functools

import jax
import jax.numpy as jnp
from jax import lax
from jax.experimental import pallas as pl
from jax.experimental.pallas import tpu as pltpu


# ----------------------------- Pallas kernel --------------------------------

def _gru_kernel(
    # inputs (in_specs order)
    u_ref, noise_ref, x0_ref, wi_ref, bi_ref, wrz_ref, wh_ref, wout_ref, bout_ref,
    # outputs
    traj_ref, out_ref,
    # scratch
    proj_scr,
    *, seq_len, batch, hidden_dim, tau,
):
    H = hidden_dim
    B = batch

    # Phase 0: all-timestep input projections (independent of x) as one matmul.
    #   proj[t*B:(t+1)*B, :] = [ir_t | iz_t | ih_t]
    proj_scr[...] = (
        jnp.dot(u_ref[...], wi_ref[...], preferred_element_type=jnp.float32)
        + bi_ref[...]
    )

    one_minus_tau = jnp.float32(1.0 - tau)
    tau_f = jnp.float32(tau)

    def step(t, x):
        row = pl.multiple_of(t * B, B)          # sublane-aligned when B % 8 == 0

        p = proj_scr[pl.ds(row, B), :]          # (B, 3H)
        # Low-rank recurrent terms for both gates in one matmul (1/H folded in).
        rz = jnp.dot(x, wrz_ref[...], preferred_element_type=jnp.float32)  # (B, 2H)
        gates = jax.nn.sigmoid(p[:, 0:2 * H] + rz)
        r = gates[:, 0:H]
        z = gates[:, H:2 * H]

        hh = jnp.dot(r * x, wh_ref[...], preferred_element_type=jnp.float32)  # (B, H)
        g = jnp.tanh(p[:, 2 * H:3 * H] + hh)
        rec_x = (1.0 - z) * g + z * x

        # Continuous-time update; noise is already scaled by noise_std.
        n_t = noise_ref[pl.ds(row, B), :]
        x_new = one_minus_tau * x + tau_f * rec_x + n_t

        traj_ref[pl.ds(row, B), :] = x_new
        return x_new

    lax.fori_loop(0, seq_len, step, x0_ref[...], unroll=True)

    # Readout for all timesteps at once, off the serial path.
    out_ref[...] = (
        jnp.dot(traj_ref[...], wout_ref[...], preferred_element_type=jnp.float32)
        + bout_ref[...]
    )


def low_rank_gru_forward(u, x0, noise, params, *, noise_std=0.05, tau=0.2):
    """u: (B, S, I) batch-major.  x0: (B, H).  noise: (S, B, H).

    Returns (output (B,S,O), x_final (B,H), trajectories (B,S,H))."""
    B, S, I = u.shape
    H = params["N_hr"].shape[0]
    O = params["W_out_T"].shape[1]

    # Time-major, flattened (S*B, ...) layouts for the kernel.
    u_flat = jnp.transpose(u, (1, 0, 2)).reshape(S * B, I).astype(jnp.float32)
    noise_flat = (jnp.float32(noise_std)
                  * noise.astype(jnp.float32)).reshape(S * B, H)

    # Pre-compose / concatenate weights (one-time cost in the wrapper).
    inv_h = jnp.float32(1.0 / H)                      # mode == 'cont'
    w_rz = jnp.concatenate(
        [jnp.dot(params["N_hr"], params["M_hr_T"]),
         jnp.dot(params["N_hz"], params["M_hz_T"])], axis=1) * inv_h   # (H, 2H)
    w_h = jnp.dot(params["N_hh"], params["M_hh_T"]) * inv_h            # (H, H)
    wi = jnp.concatenate(
        [params["W_ir_T"], params["W_iz_T"], params["W_ih_T"]], axis=1)  # (I, 3H)
    bi = jnp.concatenate(
        [params["b_ir"], params["b_iz"], params["b_ih"]], axis=1)        # (1, 3H)

    full2 = lambda i: (0, 0)
    in_specs = [
        pl.BlockSpec((S * B, I), full2),      # u (time-major, flat)
        pl.BlockSpec((S * B, H), full2),      # noise (pre-scaled)
        pl.BlockSpec((B, H), full2),          # x0
        pl.BlockSpec((I, 3 * H), full2),      # [W_ir|W_iz|W_ih]^T
        pl.BlockSpec((1, 3 * H), full2),      # [b_ir|b_iz|b_ih]
        pl.BlockSpec((H, 2 * H), full2),      # composed W_rz (1/H folded)
        pl.BlockSpec((H, H), full2),          # composed W_h  (1/H folded)
        pl.BlockSpec((H, O), full2),          # W_out^T
        pl.BlockSpec((1, O), full2),          # b_out
    ]
    out_specs = [
        pl.BlockSpec((S * B, H), full2),      # trajectories (time-major, flat)
        pl.BlockSpec((S * B, O), full2),      # output       (time-major, flat)
    ]
    out_shape = [
        jax.ShapeDtypeStruct((S * B, H), jnp.float32),
        jax.ShapeDtypeStruct((S * B, O), jnp.float32),
    ]

    kernel = functools.partial(
        _gru_kernel, seq_len=S, batch=B, hidden_dim=H, tau=tau)

    traj_flat, out_flat = pl.pallas_call(
        kernel,
        out_shape=out_shape,
        grid_spec=pltpu.PrefetchScalarGridSpec(
            num_scalar_prefetch=0,
            grid=(1,),                          # single invocation; loop inside
            in_specs=in_specs,
            out_specs=out_specs,
            scratch_shapes=[pltpu.VMEM((S * B, 3 * H), jnp.float32)],
        ),
        compiler_params=pltpu.CompilerParams(
            dimension_semantics=("arbitrary",)),
    )(
        u_flat, noise_flat, x0.astype(jnp.float32),
        wi, bi, w_rz, w_h,
        params["W_out_T"].astype(jnp.float32),
        params["b_out"].astype(jnp.float32),
    )

    traj_tm = traj_flat.reshape(S, B, H)
    out_tm = out_flat.reshape(S, B, O)
    trajectories = jnp.transpose(traj_tm, (1, 0, 2))   # (B, S, H)
    output = jnp.transpose(out_tm, (1, 0, 2))          # (B, S, O)
    x_fin = traj_tm[-1]                                # (B, H) == last state
    return output, x_fin, trajectories


# ------------------------- pure-JAX reference --------------------------------

def reference_forward(u, x0, noise, params, *, noise_std=0.05, tau=0.2):
    H = params["W_ir_T"].shape[1]
    u_tm = jnp.transpose(u, (1, 0, 2))

    def step(x, inp):
        u_t, n_t = inp
        ir = u_t @ params["W_ir_T"] + params["b_ir"]
        iz = u_t @ params["W_iz_T"] + params["b_iz"]
        ih = u_t @ params["W_ih_T"] + params["b_ih"]
        hr = (x @ params["N_hr"]) @ params["M_hr_T"] / H
        hz = (x @ params["N_hz"]) @ params["M_hz_T"] / H
        r = jax.nn.sigmoid(ir + hr)
        z = jax.nn.sigmoid(iz + hz)
        hh = ((r * x) @ params["N_hh"]) @ params["M_hh_T"] / H
        g = jnp.tanh(ih + hh)
        rec_x = (1.0 - z) * g + z * x
        x_new = x + noise_std * n_t + tau * (-x + rec_x)
        return x_new, x_new

    x_fin, traj_tm = lax.scan(step, x0, (u_tm, noise))
    traj = jnp.transpose(traj_tm, (1, 0, 2))
    out = traj @ params["W_out_T"] + params["b_out"]
    return out, x_fin, traj


# --------------------------------- main --------------------------------------

def _xavier(key, shape):
    fan_in, fan_out = shape[0], shape[1]
    bound = jnp.sqrt(6.0 / (fan_in + fan_out))
    return jax.random.uniform(key, shape, jnp.float32, -bound, bound)


if __name__ == "__main__":
    # Small, module-consistent shapes (batch multiple of 8 keeps per-step
    # slices sublane-aligned in the kernel).
    B, S, I, H, O, R = 8, 8, 4, 32, 2, 2

    root = jax.random.PRNGKey(0)
    keys = jax.random.split(root, 20)

    # Deterministic parameter init (xavier-uniform like the module).
    params = {
        # nn.Linear weights are (out, in) in torch; store pre-transposed (in, out).
        "W_ir_T": _xavier(keys[0], (H, I)).T,
        "W_iz_T": _xavier(keys[1], (H, I)).T,
        "W_ih_T": _xavier(keys[2], (H, I)).T,
        "b_ir": jax.random.uniform(keys[3], (1, H), jnp.float32, -0.1, 0.1),
        "b_iz": jax.random.uniform(keys[4], (1, H), jnp.float32, -0.1, 0.1),
        "b_ih": jax.random.uniform(keys[5], (1, H), jnp.float32, -0.1, 0.1),
        "N_hr": _xavier(keys[6], (H, R)),
        "M_hr_T": _xavier(keys[7], (H, R)).T,
        "N_hz": _xavier(keys[8], (H, R)),
        "M_hz_T": _xavier(keys[9], (H, R)).T,
        "N_hh": _xavier(keys[10], (H, R)),
        "M_hh_T": _xavier(keys[11], (H, R)).T,
        "W_out_T": _xavier(keys[12], (O, H)).T,
        "b_out": jax.random.uniform(keys[13], (1, O), jnp.float32, -0.1, 0.1),
    }

    u = jax.random.normal(keys[14], (B, S, I), jnp.float32)
    x0 = jnp.zeros((B, H), jnp.float32)                      # x0=None in torch
    # torch.randn noise is generated inside forward; here we pass it in
    # deterministically so the kernel and the reference see identical noise.
    noise = jax.random.normal(keys[15], (S, B, H), jnp.float32)

    out, x_fin, traj = low_rank_gru_forward(u, x0, noise, params)
    jax.block_until_ready((out, x_fin, traj))

    out_r, x_fin_r, traj_r = reference_forward(u, x0, noise, params)
    assert jnp.allclose(out, out_r, atol=2e-5, rtol=2e-5)
    assert jnp.allclose(x_fin, x_fin_r, atol=2e-5, rtol=2e-5)
    assert jnp.allclose(traj, traj_r, atol=2e-5, rtol=2e-5)

    print("KERNEL_OK")
</pallas_src>

<mosaic_0001>
module attributes {stable_mosaic.version = 11 : i64} {
  func.func @_gru_kernel(%arg0: i32, %arg1: memref<64x4xf32, #tpu.memory_space<vmem>>, %arg2: memref<64x32xf32, #tpu.memory_space<vmem>>, %arg3: memref<8x32xf32, #tpu.memory_space<vmem>>, %arg4: memref<4x96xf32, #tpu.memory_space<vmem>>, %arg5: memref<1x96xf32, #tpu.memory_space<vmem>>, %arg6: memref<32x64xf32, #tpu.memory_space<vmem>>, %arg7: memref<32x32xf32, #tpu.memory_space<vmem>>, %arg8: memref<32x2xf32, #tpu.memory_space<vmem>>, %arg9: memref<1x2xf32, #tpu.memory_space<vmem>>, %arg10: memref<64x32xf32, #tpu.memory_space<vmem>>, %arg11: memref<64x2xf32, #tpu.memory_space<vmem>>, %arg12: memref<64x96xf32, #tpu.memory_space<vmem>>) attributes {dimension_semantics = [#tpu.dimension_semantics<arbitrary>], iteration_bounds = array<i64: 1>, scalar_prefetch = 0 : i64, scratch_operands = 1 : i64, tpu.core_type = #tpu.core_type<tc>, window_params = [{pipeline_mode = #tpu.pipeline_mode<synchronous>, transform_indices = @transform_0, window_bounds = array<i64: 64, 4>}, {pipeline_mode = #tpu.pipeline_mode<synchronous>, transform_indices = @transform_1, window_bounds = array<i64: 64, 32>}, {pipeline_mode = #tpu.pipeline_mode<synchronous>, transform_indices = @transform_2, window_bounds = array<i64: 8, 32>}, {pipeline_mode = #tpu.pipeline_mode<synchronous>, transform_indices = @transform_3, window_bounds = array<i64: 4, 96>}, {pipeline_mode = #tpu.pipeline_mode<synchronous>, transform_indices = @transform_4, window_bounds = array<i64: 1, 96>}, {pipeline_mode = #tpu.pipeline_mode<synchronous>, transform_indices = @transform_5, window_bounds = array<i64: 32, 64>}, {pipeline_mode = #tpu.pipeline_mode<synchronous>, transform_indices = @transform_6, window_bounds = array<i64: 32, 32>}, {pipeline_mode = #tpu.pipeline_mode<synchronous>, transform_indices = @transform_7, window_bounds = array<i64: 32, 2>}, {pipeline_mode = #tpu.pipeline_mode<synchronous>, transform_indices = @transform_8, window_bounds = array<i64: 1, 2>}, {pipeline_mode = #tpu.pipeline_mode<synchronous>, transform_indices = @transform_9, window_bounds = array<i64: 64, 32>}, {pipeline_mode = #tpu.pipeline_mode<synchronous>, transform_indices = @transform_10, window_bounds = array<i64: 64, 2>}]} {
    %c0 = arith.constant 0 : index
    %c0_0 = arith.constant 0 : index
    %0 = vector.load %arg1[%c0, %c0_0] : memref<64x4xf32, #tpu.memory_space<vmem>>, vector<64x4xf32>
    %c0_1 = arith.constant 0 : index
    %c0_2 = arith.constant 0 : index
    %1 = vector.load %arg4[%c0_1, %c0_2] : memref<4x96xf32, #tpu.memory_space<vmem>>, vector<4x96xf32>
    %cst = arith.constant dense<0.000000e+00> : vector<64x96xf32>
    %2 = tpu.matmul %0, %1, %cst {dimension_numbers = #tpu.dot_dimension_numbers<[1], [0], [0], [1], [0, 0, 1, 1], [], []>} : vector<64x4xf32>, vector<4x96xf32>, vector<64x96xf32> -> vector<64x96xf32>
    %c0_3 = arith.constant 0 : index
    %c0_4 = arith.constant 0 : index
    %3 = vector.load %arg5[%c0_3, %c0_4] : memref<1x96xf32, #tpu.memory_space<vmem>>, vector<1x96xf32>
    %4 = vector.broadcast %3 : vector<1x96xf32> to vector<64x96xf32>
    %5 = arith.addf %2, %4 : vector<64x96xf32>
    %c0_5 = arith.constant 0 : index
    %c0_6 = arith.constant 0 : index
    %6 = vector.load %arg12[%c0_5, %c0_6] : memref<64x96xf32, #tpu.memory_space<vmem>>, vector<64x96xf32>
    tpu.vector_store %arg12[%c0_5, %c0_6], %5 {strides = array<i32>} : memref<64x96xf32, #tpu.memory_space<vmem>>, vector<64x96xf32>,
    %c0_7 = arith.constant 0 : index
    %c0_8 = arith.constant 0 : index
    %7 = vector.load %arg3[%c0_7, %c0_8] : memref<8x32xf32, #tpu.memory_space<vmem>>, vector<8x32xf32>
    %cst_9 = arith.constant 8.000000e-01 : f32
    %cst_10 = arith.constant 2.000000e-01 : f32
    %c0_i32 = arith.constant 0 : i32
    %c8_i32 = arith.constant 8 : i32
    %8 = arith.muli %c0_i32, %c8_i32 : i32
    %9 = tpu.assume_multiple %8, 8 : i32
    %10 = arith.index_cast %9 : i32 to index
    %c0_11 = arith.constant 0 : index
    %11 = vector.load %arg12[%10, %c0_11] : memref<64x96xf32, #tpu.memory_space<vmem>>, vector<8x96xf32>
    %c0_12 = arith.constant 0 : index
    %c0_13 = arith.constant 0 : index
    %12 = vector.load %arg6[%c0_12, %c0_13] : memref<32x64xf32, #tpu.memory_space<vmem>>, vector<32x64xf32>
    %cst_14 = arith.constant dense<0.000000e+00> : vector<8x64xf32>
    %13 = tpu.matmul %7, %12, %cst_14 {dimension_numbers = #tpu.dot_dimension_numbers<[1], [0], [0], [1], [0, 0, 1, 1], [], []>} : vector<8x32xf32>, vector<32x64xf32>, vector<8x64xf32> -> vector<8x64xf32>
    %14 = vector.extract_strided_slice %11 {offsets = [0, 0], sizes = [8, 64], strides = [1, 1]} : vector<8x96xf32> to vector<8x64xf32>
    %15 = arith.addf %14, %13 : vector<8x64xf32>
    %16 = arith.negf %15 : vector<8x64xf32>
    %17 = math.exp %16 : vector<8x64xf32>
    %cst_15 = arith.constant 1.000000e+00 : f32
    %18 = vector.broadcast %cst_15 : f32 to vector<8x64xf32>
    %19 = arith.addf %18, %17 : vector<8x64xf32>
    %20 = arith.divf %18, %19 : vector<8x64xf32>
    %21 = vector.extract_strided_slice %20 {offsets = [0, 0], sizes = [8, 32], strides = [1, 1]} : vector<8x64xf32> to vector<8x32xf32>
    %22 = vector.extract_strided_slice %20 {offsets = [0, 32], sizes = [8, 32], strides = [1, 1]} : vector<8x64xf32> to vector<8x32xf32>
    %23 = arith.mulf %21, %7 : vector<8x32xf32>
    %c0_16 = arith.constant 0 : index
    %c0_17 = arith.constant 0 : index
    %24 = vector.load %arg7[%c0_16, %c0_17] : memref<32x32xf32, #tpu.memory_space<vmem>>, vector<32x32xf32>
    %cst_18 = arith.constant dense<0.000000e+00> : vector<8x32xf32>
    %25 = tpu.matmul %23, %24, %cst_18 {dimension_numbers = #tpu.dot_dimension_numbers<[1], [0], [0], [1], [0, 0, 1, 1], [], []>} : vector<8x32xf32>, vector<32x32xf32>, vector<8x32xf32> -> vector<8x32xf32>
    %26 = vector.extract_strided_slice %11 {offsets = [0, 64], sizes = [8, 32], strides = [1, 1]} : vector<8x96xf32> to vector<8x32xf32>
    %27 = arith.addf %26, %25 : vector<8x32xf32>
    %28 = math.tanh %27 : vector<8x32xf32>
    %cst_19 = arith.constant 1.000000e+00 : f32
    %29 = vector.broadcast %cst_19 : f32 to vector<8x32xf32>
    %30 = arith.subf %29, %22 : vector<8x32xf32>
    %31 = arith.mulf %30, %28 : vector<8x32xf32>
    %32 = arith.mulf %22, %7 : vector<8x32xf32>
    %33 = arith.addf %31, %32 : vector<8x32xf32>
    %34 = arith.index_cast %9 : i32 to index
    %c0_20 = arith.constant 0 : index
    %35 = vector.load %arg2[%34, %c0_20] : memref<64x32xf32, #tpu.memory_space<vmem>>, vector<8x32xf32>
    %36 = vector.broadcast %cst_9 : f32 to vector<8x32xf32>
    %37 = arith.mulf %36, %7 : vector<8x32xf32>
    %38 = vector.broadcast %cst_10 : f32 to vector<8x32xf32>
    %39 = arith.mulf %38, %33 : vector<8x32xf32>
    %40 = arith.addf %37, %39 : vector<8x32xf32>
    %41 = arith.addf %40, %35 : vector<8x32xf32>
    %42 = arith.index_cast %9 : i32 to index
    %c0_21 = arith.constant 0 : index
    %43 = vector.load %arg10[%42, %c0_21] : memref<64x32xf32, #tpu.memory_space<vmem>>, vector<8x32xf32>
    tpu.vector_store %arg10[%42, %c0_21], %41 {strides = array<i32>} : memref<64x32xf32, #tpu.memory_space<vmem>>, vector<8x32xf32>,
    %c1_i32 = arith.constant 1 : i32
    %c8_i32_22 = arith.constant 8 : i32
    %44 = arith.muli %c1_i32, %c8_i32_22 : i32
    %45 = tpu.assume_multiple %44, 8 : i32
    %46 = arith.index_cast %45 : i32 to index
    %c0_23 = arith.constant 0 : index
    %47 = vector.load %arg12[%46, %c0_23] : memref<64x96xf32, #tpu.memory_space<vmem>>, vector<8x96xf32>
    %c0_24 = arith.constant 0 : index
    %c0_25 = arith.constant 0 : index
    %48 = vector.load %arg6[%c0_24, %c0_25] : memref<32x64xf32, #tpu.memory_space<vmem>>, vector<32x64xf32>
    %cst_26 = arith.constant dense<0.000000e+00> : vector<8x64xf32>
    %49 = tpu.matmul %41, %48, %cst_26 {dimension_numbers = #tpu.dot_dimension_numbers<[1], [0], [0], [1], [0, 0, 1, 1], [], []>} : vector<8x32xf32>, vector<32x64xf32>, vector<8x64xf32> -> vector<8x64xf32>
    %50 = vector.extract_strided_slice %47 {offsets = [0, 0], sizes = [8, 64], strides = [1, 1]} : vector<8x96xf32> to vector<8x64xf32>
    %51 = arith.addf %50, %49 : vector<8x64xf32>
    %52 = arith.negf %51 : vector<8x64xf32>
    %53 = math.exp %52 : vector<8x64xf32>
    %cst_27 = arith.constant 1.000000e+00 : f32
    %54 = vector.broadcast %cst_27 : f32 to vector<8x64xf32>
    %55 = arith.addf %54, %53 : vector<8x64xf32>
    %56 = arith.divf %54, %55 : vector<8x64xf32>
    %57 = vector.extract_strided_slice %56 {offsets = [0, 0], sizes = [8, 32], strides = [1, 1]} : vector<8x64xf32> to vector<8x32xf32>
    %58 = vector.extract_strided_slice %56 {offsets = [0, 32], sizes = [8, 32], strides = [1, 1]} : vector<8x64xf32> to vector<8x32xf32>
    %59 = arith.mulf %57, %41 : vector<8x32xf32>
    %c0_28 = arith.constant 0 : index
    %c0_29 = arith.constant 0 : index
    %60 = vector.load %arg7[%c0_28, %c0_29] : memref<32x32xf32, #tpu.memory_space<vmem>>, vector<32x32xf32>
    %cst_30 = arith.constant dense<0.000000e+00> : vector<8x32xf32>
    %61 = tpu.matmul %59, %60, %cst_30 {dimension_numbers = #tpu.dot_dimension_numbers<[1], [0], [0], [1], [0, 0, 1, 1], [], []>} : vector<8x32xf32>, vector<32x32xf32>, vector<8x32xf32> -> vector<8x32xf32>
    %62 = vector.extract_strided_slice %47 {offsets = [0, 64], sizes = [8, 32], strides = [1, 1]} : vector<8x96xf32> to vector<8x32xf32>
    %63 = arith.addf %62, %61 : vector<8x32xf32>
    %64 = math.tanh %63 : vector<8x32xf32>
    %cst_31 = arith.constant 1.000000e+00 : f32
    %65 = vector.broadcast %cst_31 : f32 to vector<8x32xf32>
    %66 = arith.subf %65, %58 : vector<8x32xf32>
    %67 = arith.mulf %66, %64 : vector<8x32xf32>
    %68 = arith.mulf %58, %41 : vector<8x32xf32>
    %69 = arith.addf %67, %68 : vector<8x32xf32>
    %70 = arith.index_cast %45 : i32 to index
    %c0_32 = arith.constant 0 : index
    %71 = vector.load %arg2[%70, %c0_32] : memref<64x32xf32, #tpu.memory_space<vmem>>, vector<8x32xf32>
    %72 = vector.broadcast %cst_9 : f32 to vector<8x32xf32>
    %73 = arith.mulf %72, %41 : vector<8x32xf32>
    %74 = vector.broadcast %cst_10 : f32 to vector<8x32xf32>
    %75 = arith.mulf %74, %69 : vector<8x32xf32>
    %76 = arith.addf %73, %75 : vector<8x32xf32>
    %77 = arith.addf %76, %71 : vector<8x32xf32>
    %78 = arith.index_cast %45 : i32 to index
    %c0_33 = arith.constant 0 : index
    %79 = vector.load %arg10[%78, %c0_33] : memref<64x32xf32, #tpu.memory_space<vmem>>, vector<8x32xf32>
    tpu.vector_store %arg10[%78, %c0_33], %77 {strides = array<i32>} : memref<64x32xf32, #tpu.memory_space<vmem>>, vector<8x32xf32>,
    %c2_i32 = arith.constant 2 : i32
    %c8_i32_34 = arith.constant 8 : i32
    %80 = arith.muli %c2_i32, %c8_i32_34 : i32
    %81 = tpu.assume_multiple %80, 8 : i32
    %82 = arith.index_cast %81 : i32 to index
    %c0_35 = arith.constant 0 : index
    %83 = vector.load %arg12[%82, %c0_35] : memref<64x96xf32, #tpu.memory_space<vmem>>, vector<8x96xf32>
    %c0_36 = arith.constant 0 : index
    %c0_37 = arith.constant 0 : index
    %84 = vector.load %arg6[%c0_36, %c0_37] : memref<32x64xf32, #tpu.memory_space<vmem>>, vector<32x64xf32>
    %cst_38 = arith.constant dense<0.000000e+00> : vector<8x64xf32>
    %85 = tpu.matmul %77, %84, %cst_38 {dimension_numbers = #tpu.dot_dimension_numbers<[1], [0], [0], [1], [0, 0, 1, 1], [], []>} : vector<8x32xf32>, vector<32x64xf32>, vector<8x64xf32> -> vector<8x64xf32>
    %86 = vector.extract_strided_slice %83 {offsets = [0, 0], sizes = [8, 64], strides = [1, 1]} : vector<8x96xf32> to vector<8x64xf32>
    %87 = arith.addf %86, %85 : vector<8x64xf32>
    %88 = arith.negf %87 : vector<8x64xf32>
    %89 = math.exp %88 : vector<8x64xf32>
    %cst_39 = arith.constant 1.000000e+00 : f32
    %90 = vector.broadcast %cst_39 : f32 to vector<8x64xf32>
    %91 = arith.addf %90, %89 : vector<8x64xf32>
    %92 = arith.divf %90, %91 : vector<8x64xf32>
    %93 = vector.extract_strided_slice %92 {offsets = [0, 0], sizes = [8, 32], strides = [1, 1]} : vector<8x64xf32> to vector<8x32xf32>
    %94 = vector.extract_strided_slice %92 {offsets = [0, 32], sizes = [8, 32], strides = [1, 1]} : vector<8x64xf32> to vector<8x32xf32>
    %95 = arith.mulf %93, %77 : vector<8x32xf32>
    %c0_40 = arith.constant 0 : index
    %c0_41 = arith.constant 0 : index
    %96 = vector.load %arg7[%c0_40, %c0_41] : memref<32x32xf32, #tpu.memory_space<vmem>>, vector<32x32xf32>
    %cst_42 = arith.constant dense<0.000000e+00> : vector<8x32xf32>
    %97 = tpu.matmul %95, %96, %cst_42 {dimension_numbers = #tpu.dot_dimension_numbers<[1], [0], [0], [1], [0, 0, 1, 1], [], []>} : vector<8x32xf32>, vector<32x32xf32>, vector<8x32xf32> -> vector<8x32xf32>
    %98 = vector.extract_strided_slice %83 {offsets = [0, 64], sizes = [8, 32], strides = [1, 1]} : vector<8x96xf32> to vector<8x32xf32>
    %99 = arith.addf %98, %97 : vector<8x32xf32>
    %100 = math.tanh %99 : vector<8x32xf32>
    %cst_43 = arith.constant 1.000000e+00 : f32
    %101 = vector.broadcast %cst_43 : f32 to vector<8x32xf32>
    %102 = arith.subf %101, %94 : vector<8x32xf32>
    %103 = arith.mulf %102, %100 : vector<8x32xf32>
    %104 = arith.mulf %94, %77 : vector<8x32xf32>
    %105 = arith.addf %103, %104 : vector<8x32xf32>
    %106 = arith.index_cast %81 : i32 to index
    %c0_44 = arith.constant 0 : index
    %107 = vector.load %arg2[%106, %c0_44] : memref<64x32xf32, #tpu.memory_space<vmem>>, vector<8x32xf32>
    %108 = vector.broadcast %cst_9 : f32 to vector<8x32xf32>
    %109 = arith.mulf %108, %77 : vector<8x32xf32>
    %110 = vector.broadcast %cst_10 : f32 to vector<8x32xf32>
    %111 = arith.mulf %110, %105 : vector<8x32xf32>
    %112 = arith.addf %109, %111 : vector<8x32xf32>
    %113 = arith.addf %112, %107 : vector<8x32xf32>
    %114 = arith.index_cast %81 : i32 to index
    %c0_45 = arith.constant 0 : index
    %115 = vector.load %arg10[%114, %c0_45] : memref<64x32xf32, #tpu.memory_space<vmem>>, vector<8x32xf32>
    tpu.vector_store %arg10[%114, %c0_45], %113 {strides = array<i32>} : memref<64x32xf32, #tpu.memory_space<vmem>>, vector<8x32xf32>,
    %c3_i32 = arith.constant 3 : i32
    %c8_i32_46 = arith.constant 8 : i32
    %116 = arith.muli %c3_i32, %c8_i32_46 : i32
    %117 = tpu.assume_multiple %116, 8 : i32
    %118 = arith.index_cast %117 : i32 to index
    %c0_47 = arith.constant 0 : index
    %119 = vector.load %arg12[%118, %c0_47] : memref<64x96xf32, #tpu.memory_space<vmem>>, vector<8x96xf32>
    %c0_48 = arith.constant 0 : index
    %c0_49 = arith.constant 0 : index
    %120 = vector.load %arg6[%c0_48, %c0_49] : memref<32x64xf32, #tpu.memory_space<vmem>>, vector<32x64xf32>
    %cst_50 = arith.constant dense<0.000000e+00> : vector<8x64xf32>
    %121 = tpu.matmul %113, %120, %cst_50 {dimension_numbers = #tpu.dot_dimension_numbers<[1], [0], [0], [1], [0, 0, 1, 1], [], []>} : vector<8x32xf32>, vector<32x64xf32>, vector<8x64xf32> -> vector<8x64xf32>
    %122 = vector.extract_strided_slice %119 {offsets = [0, 0], sizes = [8, 64], strides = [1, 1]} : vector<8x96xf32> to vector<8x64xf32>
    %123 = arith.addf %122, %121 : vector<8x64xf32>
    %124 = arith.negf %123 : vector<8x64xf32>
    %125 = math.exp %124 : vector<8x64xf32>
    %cst_51 = arith.constant 1.000000e+00 : f32
    %126 = vector.broadcast %cst_51 : f32 to vector<8x64xf32>
    %127 = arith.addf %126, %125 : vector<8x64xf32>
    %128 = arith.divf %126, %127 : vector<8x64xf32>
    %129 = vector.extract_strided_slice %128 {offsets = [0, 0], sizes = [8, 32], strides = [1, 1]} : vector<8x64xf32> to vector<8x32xf32>
    %130 = vector.extract_strided_slice %128 {offsets = [0, 32], sizes = [8, 32], strides = [1, 1]} : vector<8x64xf32> to vector<8x32xf32>
    %131 = arith.mulf %129, %113 : vector<8x32xf32>
    %c0_52 = arith.constant 0 : index
    %c0_53 = arith.constant 0 : index
    %132 = vector.load %arg7[%c0_52, %c0_53] : memref<32x32xf32, #tpu.memory_space<vmem>>, vector<32x32xf32>
    %cst_54 = arith.constant dense<0.000000e+00> : vector<8x32xf32>
    %133 = tpu.matmul %131, %132, %cst_54 {dimension_numbers = #tpu.dot_dimension_numbers<[1], [0], [0], [1], [0, 0, 1, 1], [], []>} : vector<8x32xf32>, vector<32x32xf32>, vector<8x32xf32> -> vector<8x32xf32>
    %134 = vector.extract_strided_slice %119 {offsets = [0, 64], sizes = [8, 32], strides = [1, 1]} : vector<8x96xf32> to vector<8x32xf32>
    %135 = arith.addf %134, %133 : vector<8x32xf32>
    %136 = math.tanh %135 : vector<8x32xf32>
    %cst_55 = arith.constant 1.000000e+00 : f32
    %137 = vector.broadcast %cst_55 : f32 to vector<8x32xf32>
    %138 = arith.subf %137, %130 : vector<8x32xf32>
    %139 = arith.mulf %138, %136 : vector<8x32xf32>
    %140 = arith.mulf %130, %113 : vector<8x32xf32>
    %141 = arith.addf %139, %140 : vector<8x32xf32>
    %142 = arith.index_cast %117 : i32 to index
    %c0_56 = arith.constant 0 : index
    %143 = vector.load %arg2[%142, %c0_56] : memref<64x32xf32, #tpu.memory_space<vmem>>, vector<8x32xf32>
    %144 = vector.broadcast %cst_9 : f32 to vector<8x32xf32>
    %145 = arith.mulf %144, %113 : vector<8x32xf32>
    %146 = vector.broadcast %cst_10 : f32 to vector<8x32xf32>
    %147 = arith.mulf %146, %141 : vector<8x32xf32>
    %148 = arith.addf %145, %147 : vector<8x32xf32>
    %149 = arith.addf %148, %143 : vector<8x32xf32>
    %150 = arith.index_cast %117 : i32 to index
    %c0_57 = arith.constant 0 : index
    %151 = vector.load %arg10[%150, %c0_57] : memref<64x32xf32, #tpu.memory_space<vmem>>, vector<8x32xf32>
    tpu.vector_store %arg10[%150, %c0_57], %149 {strides = array<i32>} : memref<64x32xf32, #tpu.memory_space<vmem>>, vector<8x32xf32>,
    %c4_i32 = arith.constant 4 : i32
    %c8_i32_58 = arith.constant 8 : i32
    %152 = arith.muli %c4_i32, %c8_i32_58 : i32
    %153 = tpu.assume_multiple %152, 8 : i32
    %154 = arith.index_cast %153 : i32 to index
    %c0_59 = arith.constant 0 : index
    %155 = vector.load %arg12[%154, %c0_59] : memref<64x96xf32, #tpu.memory_space<vmem>>, vector<8x96xf32>
    %c0_60 = arith.constant 0 : index
    %c0_61 = arith.constant 0 : index
    %156 = vector.load %arg6[%c0_60, %c0_61] : memref<32x64xf32, #tpu.memory_space<vmem>>, vector<32x64xf32>
    %cst_62 = arith.constant dense<0.000000e+00> : vector<8x64xf32>
    %157 = tpu.matmul %149, %156, %cst_62 {dimension_numbers = #tpu.dot_dimension_numbers<[1], [0], [0], [1], [0, 0, 1, 1], [], []>} : vector<8x32xf32>, vector<32x64xf32>, vector<8x64xf32> -> vector<8x64xf32>
    %158 = vector.extract_strided_slice %155 {offsets = [0, 0], sizes = [8, 64], strides = [1, 1]} : vector<8x96xf32> to vector<8x64xf32>
    %159 = arith.addf %158, %157 : vector<8x64xf32>
    %160 = arith.negf %159 : vector<8x64xf32>
    %161 = math.exp %160 : vector<8x64xf32>
    %cst_63 = arith.constant 1.000000e+00 : f32
    %162 = vector.broadcast %cst_63 : f32 to vector<8x64xf32>
    %163 = arith.addf %162, %161 : vector<8x64xf32>
    %164 = arith.divf %162, %163 : vector<8x64xf32>
    %165 = vector.extract_strided_slice %164 {offsets = [0, 0], sizes = [8, 32], strides = [1, 1]} : vector<8x64xf32> to vector<8x32xf32>
    %166 = vector.extract_strided_slice %164 {offsets = [0, 32], sizes = [8, 32], strides = [1, 1]} : vector<8x64xf32> to vector<8x32xf32>
    %167 = arith.mulf %165, %149 : vector<8x32xf32>
    %c0_64 = arith.constant 0 : index
    %c0_65 = arith.constant 0 : index
    %168 = vector.load %arg7[%c0_64, %c0_65] : memref<32x32xf32, #tpu.memory_space<vmem>>, vector<32x32xf32>
    %cst_66 = arith.constant dense<0.000000e+00> : vector<8x32xf32>
    %169 = tpu.matmul %167, %168, %cst_66 {dimension_numbers = #tpu.dot_dimension_numbers<[1], [0], [0], [1], [0, 0, 1, 1], [], []>} : vector<8x32xf32>, vector<32x32xf32>, vector<8x32xf32> -> vector<8x32xf32>
    %170 = vector.extract_strided_slice %155 {offsets = [0, 64], sizes = [8, 32], strides = [1, 1]} : vector<8x96xf32> to vector<8x32xf32>
    %171 = arith.addf %170, %169 : vector<8x32xf32>
    %172 = math.tanh %171 : vector<8x32xf32>
    %cst_67 = arith.constant 1.000000e+00 : f32
    %173 = vector.broadcast %cst_67 : f32 to vector<8x32xf32>
    %174 = arith.subf %173, %166 : vector<8x32xf32>
    %175 = arith.mulf %174, %172 : vector<8x32xf32>
    %176 = arith.mulf %166, %149 : vector<8x32xf32>
    %177 = arith.addf %175, %176 : vector<8x32xf32>
    %178 = arith.index_cast %153 : i32 to index
    %c0_68 = arith.constant 0 : index
    %179 = vector.load %arg2[%178, %c0_68] : memref<64x32xf32, #tpu.memory_space<vmem>>, vector<8x32xf32>
    %180 = vector.broadcast %cst_9 : f32 to vector<8x32xf32>
    %181 = arith.mulf %180, %149 : vector<8x32xf32>
    %182 = vector.broadcast %cst_10 : f32 to vector<8x32xf32>
    %183 = arith.mulf %182, %177 : vector<8x32xf32>
    %184 = arith.addf %181, %183 : vector<8x32xf32>
    %185 = arith.addf %184, %179 : vector<8x32xf32>
    %186 = arith.index_cast %153 : i32 to index
    %c0_69 = arith.constant 0 : index
    %187 = vector.load %arg10[%186, %c0_69] : memref<64x32xf32, #tpu.memory_space<vmem>>, vector<8x32xf32>
    tpu.vector_store %arg10[%186, %c0_69], %185 {strides = array<i32>} : memref<64x32xf32, #tpu.memory_space<vmem>>, vector<8x32xf32>,
    %c5_i32 = arith.constant 5 : i32
    %c8_i32_70 = arith.constant 8 : i32
    %188 = arith.muli %c5_i32, %c8_i32_70 : i32
    %189 = tpu.assume_multiple %188, 8 : i32
    %190 = arith.index_cast %189 : i32 to index
    %c0_71 = arith.constant 0 : index
    %191 = vector.load %arg12[%190, %c0_71] : memref<64x96xf32, #tpu.memory_space<vmem>>, vector<8x96xf32>
    %c0_72 = arith.constant 0 : index
    %c0_73 = arith.constant 0 : index
    %192 = vector.load %arg6[%c0_72, %c0_73] : memref<32x64xf32, #tpu.memory_space<vmem>>, vector<32x64xf32>
    %cst_74 = arith.constant dense<0.000000e+00> : vector<8x64xf32>
    %193 = tpu.matmul %185, %192, %cst_74 {dimension_numbers = #tpu.dot_dimension_numbers<[1], [0], [0], [1], [0, 0, 1, 1], [], []>} : vector<8x32xf32>, vector<32x64xf32>, vector<8x64xf32> -> vector<8x64xf32>
    %194 = vector.extract_strided_slice %191 {offsets = [0, 0], sizes = [8, 64], strides = [1, 1]} : vector<8x96xf32> to vector<8x64xf32>
    %195 = arith.addf %194, %193 : vector<8x64xf32>
    %196 = arith.negf %195 : vector<8x64xf32>
    %197 = math.exp %196 : vector<8x64xf32>
    %cst_75 = arith.constant 1.000000e+00 : f32
    %198 = vector.broadcast %cst_75 : f32 to vector<8x64xf32>
    %199 = arith.addf %198, %197 : vector<8x64xf32>
    %200 = arith.divf %198, %199 : vector<8x64xf32>
    %201 = vector.extract_strided_slice %200 {offsets = [0, 0], sizes = [8, 32], strides = [1, 1]} : vector<8x64xf32> to vector<8x32xf32>
    %202 = vector.extract_strided_slice %200 {offsets = [0, 32], sizes = [8, 32], strides = [1, 1]} : vector<8x64xf32> to vector<8x32xf32>
    %203 = arith.mulf %201, %185 : vector<8x32xf32>
    %c0_76 = arith.constant 0 : index
    %c0_77 = arith.constant 0 : index
    %204 = vector.load %arg7[%c0_76, %c0_77] : memref<32x32xf32, #tpu.memory_space<vmem>>, vector<32x32xf32>
    %cst_78 = arith.constant dense<0.000000e+00> : vector<8x32xf32>
    %205 = tpu.matmul %203, %204, %cst_78 {dimension_numbers = #tpu.dot_dimension_numbers<[1], [0], [0], [1], [0, 0, 1, 1], [], []>} : vector<8x32xf32>, vector<32x32xf32>, vector<8x32xf32> -> vector<8x32xf32>
    %206 = vector.extract_strided_slice %191 {offsets = [0, 64], sizes = [8, 32], strides = [1, 1]} : vector<8x96xf32> to vector<8x32xf32>
    %207 = arith.addf %206, %205 : vector<8x32xf32>
    %208 = math.tanh %207 : vector<8x32xf32>
    %cst_79 = arith.constant 1.000000e+00 : f32
    %209 = vector.broadcast %cst_79 : f32 to vector<8x32xf32>
    %210 = arith.subf %209, %202 : vector<8x32xf32>
    %211 = arith.mulf %210, %208 : vector<8x32xf32>
    %212 = arith.mulf %202, %185 : vector<8x32xf32>
    %213 = arith.addf %211, %212 : vector<8x32xf32>
    %214 = arith.index_cast %189 : i32 to index
    %c0_80 = arith.constant 0 : index
    %215 = vector.load %arg2[%214, %c0_80] : memref<64x32xf32, #tpu.memory_space<vmem>>, vector<8x32xf32>
    %216 = vector.broadcast %cst_9 : f32 to vector<8x32xf32>
    %217 = arith.mulf %216, %185 : vector<8x32xf32>
    %218 = vector.broadcast %cst_10 : f32 to vector<8x32xf32>
    %219 = arith.mulf %218, %213 : vector<8x32xf32>
    %220 = arith.addf %217, %219 : vector<8x32xf32>
    %221 = arith.addf %220, %215 : vector<8x32xf32>
    %222 = arith.index_cast %189 : i32 to index
    %c0_81 = arith.constant 0 : index
    %223 = vector.load %arg10[%222, %c0_81] : memref<64x32xf32, #tpu.memory_space<vmem>>, vector<8x32xf32>
    tpu.vector_store %arg10[%222, %c0_81], %221 {strides = array<i32>} : memref<64x32xf32, #tpu.memory_space<vmem>>, vector<8x32xf32>,
    %c6_i32 = arith.constant 6 : i32
    %c8_i32_82 = arith.constant 8 : i32
    %224 = arith.muli %c6_i32, %c8_i32_82 : i32
    %225 = tpu.assume_multiple %224, 8 : i32
    %226 = arith.index_cast %225 : i32 to index
    %c0_83 = arith.constant 0 : index
    %227 = vector.load %arg12[%226, %c0_83] : memref<64x96xf32, #tpu.memory_space<vmem>>, vector<8x96xf32>
    %c0_84 = arith.constant 0 : index
    %c0_85 = arith.constant 0 : index
    %228 = vector.load %arg6[%c0_84, %c0_85] : memref<32x64xf32, #tpu.memory_space<vmem>>, vector<32x64xf32>
    %cst_86 = arith.constant dense<0.000000e+00> : vector<8x64xf32>
    %229 = tpu.matmul %221, %228, %cst_86 {dimension_numbers = #tpu.dot_dimension_numbers<[1], [0], [0], [1], [0, 0, 1, 1], [], []>} : vector<8x32xf32>, vector<32x64xf32>, vector<8x64xf32> -> vector<8x64xf32>
    %230 = vector.extract_strided_slice %227 {offsets = [0, 0], sizes = [8, 64], strides = [1, 1]} : vector<8x96xf32> to vector<8x64xf32>
    %231 = arith.addf %230, %229 : vector<8x64xf32>
    %232 = arith.negf %231 : vector<8x64xf32>
    %233 = math.exp %232 : vector<8x64xf32>
    %cst_87 = arith.constant 1.000000e+00 : f32
    %234 = vector.broadcast %cst_87 : f32 to vector<8x64xf32>
    %235 = arith.addf %234, %233 : vector<8x64xf32>
    %236 = arith.divf %234, %235 : vector<8x64xf32>
    %237 = vector.extract_strided_slice %236 {offsets = [0, 0], sizes = [8, 32], strides = [1, 1]} : vector<8x64xf32> to vector<8x32xf32>
    %238 = vector.extract_strided_slice %236 {offsets = [0, 32], sizes = [8, 32], strides = [1, 1]} : vector<8x64xf32> to vector<8x32xf32>
    %239 = arith.mulf %237, %221 : vector<8x32xf32>
    %c0_88 = arith.constant 0 : index
    %c0_89 = arith.constant 0 : index
    %240 = vector.load %arg7[%c0_88, %c0_89] : memref<32x32xf32, #tpu.memory_space<vmem>>, vector<32x32xf32>
    %cst_90 = arith.constant dense<0.000000e+00> : vector<8x32xf32>
    %241 = tpu.matmul %239, %240, %cst_90 {dimension_numbers = #tpu.dot_dimension_numbers<[1], [0], [0], [1], [0, 0, 1, 1], [], []>} : vector<8x32xf32>, vector<32x32xf32>, vector<8x32xf32> -> vector<8x32xf32>
    %242 = vector.extract_strided_slice %227 {offsets = [0, 64], sizes = [8, 32], strides = [1, 1]} : vector<8x96xf32> to vector<8x32xf32>
    %243 = arith.addf %242, %241 : vector<8x32xf32>
    %244 = math.tanh %243 : vector<8x32xf32>
    %cst_91 = arith.constant 1.000000e+00 : f32
    %245 = vector.broadcast %cst_91 : f32 to vector<8x32xf32>
    %246 = arith.subf %245, %238 : vector<8x32xf32>
    %247 = arith.mulf %246, %244 : vector<8x32xf32>
    %248 = arith.mulf %238, %221 : vector<8x32xf32>
    %249 = arith.addf %247, %248 : vector<8x32xf32>
    %250 = arith.index_cast %225 : i32 to index
    %c0_92 = arith.constant 0 : index
    %251 = vector.load %arg2[%250, %c0_92] : memref<64x32xf32, #tpu.memory_space<vmem>>, vector<8x32xf32>
    %252 = vector.broadcast %cst_9 : f32 to vector<8x32xf32>
    %253 = arith.mulf %252, %221 : vector<8x32xf32>
    %254 = vector.broadcast %cst_10 : f32 to vector<8x32xf32>
    %255 = arith.mulf %254, %249 : vector<8x32xf32>
    %256 = arith.addf %253, %255 : vector<8x32xf32>
    %257 = arith.addf %256, %251 : vector<8x32xf32>
    %258 = arith.index_cast %225 : i32 to index
    %c0_93 = arith.constant 0 : index
    %259 = vector.load %arg10[%258, %c0_93] : memref<64x32xf32, #tpu.memory_space<vmem>>, vector<8x32xf32>
    tpu.vector_store %arg10[%258, %c0_93], %257 {strides = array<i32>} : memref<64x32xf32, #tpu.memory_space<vmem>>, vector<8x32xf32>,
    %c7_i32 = arith.constant 7 : i32
    %c8_i32_94 = arith.constant 8 : i32
    %260 = arith.muli %c7_i32, %c8_i32_94 : i32
    %261 = tpu.assume_multiple %260, 8 : i32
    %262 = arith.index_cast %261 : i32 to index
    %c0_95 = arith.constant 0 : index
    %263 = vector.load %arg12[%262, %c0_95] : memref<64x96xf32, #tpu.memory_space<vmem>>, vector<8x96xf32>
    %c0_96 = arith.constant 0 : index
    %c0_97 = arith.constant 0 : index
    %264 = vector.load %arg6[%c0_96, %c0_97] : memref<32x64xf32, #tpu.memory_space<vmem>>, vector<32x64xf32>
    %cst_98 = arith.constant dense<0.000000e+00> : vector<8x64xf32>
    %265 = tpu.matmul %257, %264, %cst_98 {dimension_numbers = #tpu.dot_dimension_numbers<[1], [0], [0], [1], [0, 0, 1, 1], [], []>} : vector<8x32xf32>, vector<32x64xf32>, vector<8x64xf32> -> vector<8x64xf32>
    %266 = vector.extract_strided_slice %263 {offsets = [0, 0], sizes = [8, 64], strides = [1, 1]} : vector<8x96xf32> to vector<8x64xf32>
    %267 = arith.addf %266, %265 : vector<8x64xf32>
    %268 = arith.negf %267 : vector<8x64xf32>
    %269 = math.exp %268 : vector<8x64xf32>
    %cst_99 = arith.constant 1.000000e+00 : f32
    %270 = vector.broadcast %cst_99 : f32 to vector<8x64xf32>
    %271 = arith.addf %270, %269 : vector<8x64xf32>
    %272 = arith.divf %270, %271 : vector<8x64xf32>
    %273 = vector.extract_strided_slice %272 {offsets = [0, 0], sizes = [8, 32], strides = [1, 1]} : vector<8x64xf32> to vector<8x32xf32>
    %274 = vector.extract_strided_slice %272 {offsets = [0, 32], sizes = [8, 32], strides = [1, 1]} : vector<8x64xf32> to vector<8x32xf32>
    %275 = arith.mulf %273, %257 : vector<8x32xf32>
    %c0_100 = arith.constant 0 : index
    %c0_101 = arith.constant 0 : index
    %276 = vector.load %arg7[%c0_100, %c0_101] : memref<32x32xf32, #tpu.memory_space<vmem>>, vector<32x32xf32>
    %cst_102 = arith.constant dense<0.000000e+00> : vector<8x32xf32>
    %277 = tpu.matmul %275, %276, %cst_102 {dimension_numbers = #tpu.dot_dimension_numbers<[1], [0], [0], [1], [0, 0, 1, 1], [], []>} : vector<8x32xf32>, vector<32x32xf32>, vector<8x32xf32> -> vector<8x32xf32>
    %278 = vector.extract_strided_slice %263 {offsets = [0, 64], sizes = [8, 32], strides = [1, 1]} : vector<8x96xf32> to vector<8x32xf32>
    %279 = arith.addf %278, %277 : vector<8x32xf32>
    %280 = math.tanh %279 : vector<8x32xf32>
    %cst_103 = arith.constant 1.000000e+00 : f32
    %281 = vector.broadcast %cst_103 : f32 to vector<8x32xf32>
    %282 = arith.subf %281, %274 : vector<8x32xf32>
    %283 = arith.mulf %282, %280 : vector<8x32xf32>
    %284 = arith.mulf %274, %257 : vector<8x32xf32>
    %285 = arith.addf %283, %284 : vector<8x32xf32>
    %286 = arith.index_cast %261 : i32 to index
    %c0_104 = arith.constant 0 : index
    %287 = vector.load %arg2[%286, %c0_104] : memref<64x32xf32, #tpu.memory_space<vmem>>, vector<8x32xf32>
    %288 = vector.broadcast %cst_9 : f32 to vector<8x32xf32>
    %289 = arith.mulf %288, %257 : vector<8x32xf32>
    %290 = vector.broadcast %cst_10 : f32 to vector<8x32xf32>
    %291 = arith.mulf %290, %285 : vector<8x32xf32>
    %292 = arith.addf %289, %291 : vector<8x32xf32>
    %293 = arith.addf %292, %287 : vector<8x32xf32>
    %294 = arith.index_cast %261 : i32 to index
    %c0_105 = arith.constant 0 : index
    %295 = vector.load %arg10[%294, %c0_105] : memref<64x32xf32, #tpu.memory_space<vmem>>, vector<8x32xf32>
    tpu.vector_store %arg10[%294, %c0_105], %293 {strides = array<i32>} : memref<64x32xf32, #tpu.memory_space<vmem>>, vector<8x32xf32>,
    %c8_i32_106 = arith.constant 8 : i32
    %c0_107 = arith.constant 0 : index
    %c0_108 = arith.constant 0 : index
    %296 = vector.load %arg10[%c0_107, %c0_108] : memref<64x32xf32, #tpu.memory_space<vmem>>, vector<64x32xf32>
    %c0_109 = arith.constant 0 : index
    %c0_110 = arith.constant 0 : index
    %297 = vector.load %arg8[%c0_109, %c0_110] : memref<32x2xf32, #tpu.memory_space<vmem>>, vector<32x2xf32>
    %cst_111 = arith.constant dense<0.000000e+00> : vector<64x2xf32>
    %298 = tpu.matmul %296, %297, %cst_111 {dimension_numbers = #tpu.dot_dimension_numbers<[1], [0], [0], [1], [0, 0, 1, 1], [], []>} : vector<64x32xf32>, vector<32x2xf32>, vector<64x2xf32> -> vector<64x2xf32>
    %c0_112 = arith.constant 0 : index
    %c0_113 = arith.constant 0 : index
    %299 = vector.load %arg9[%c0_112, %c0_113] : memref<1x2xf32, #tpu.memory_space<vmem>>, vector<1x2xf32>
    %300 = vector.broadcast %299 : vector<1x2xf32> to vector<64x2xf32>
    %301 = arith.addf %298, %300 : vector<64x2xf32>
    %c0_114 = arith.constant 0 : index
    %c0_115 = arith.constant 0 : index
    %302 = vector.load %arg11[%c0_114, %c0_115] : memref<64x2xf32, #tpu.memory_space<vmem>>, vector<64x2xf32>
    tpu.vector_store %arg11[%c0_114, %c0_115], %301 {strides = array<i32>} : memref<64x2xf32, #tpu.memory_space<vmem>>, vector<64x2xf32>,
    return
  }
  func.func @transform_0(%arg0: i32) -> (i32, i32) {
    %c0_i32 = arith.constant 0 : i32
    %c0_i32_0 = arith.constant 0 : i32
    %c0_i32_1 = arith.constant 0 : i32
    return %c0_i32, %c0_i32_0 : i32, i32
  }
  func.func @transform_1(%arg0: i32) -> (i32, i32) {
    %c0_i32 = arith.constant 0 : i32
    %c0_i32_0 = arith.constant 0 : i32
    %c0_i32_1 = arith.constant 0 : i32
    return %c0_i32, %c0_i32_0 : i32, i32
  }
  func.func @transform_2(%arg0: i32) -> (i32, i32) {
    %c0_i32 = arith.constant 0 : i32
    %c0_i32_0 = arith.constant 0 : i32
    %c0_i32_1 = arith.constant 0 : i32
    return %c0_i32, %c0_i32_0 : i32, i32
  }
  func.func @transform_3(%arg0: i32) -> (i32, i32) {
    %c0_i32 = arith.constant 0 : i32
    %c0_i32_0 = arith.constant 0 : i32
    %c0_i32_1 = arith.constant 0 : i32
    return %c0_i32, %c0_i32_0 : i32, i32
  }
  func.func @transform_4(%arg0: i32) -> (i32, i32) {
    %c0_i32 = arith.constant 0 : i32
    %c0_i32_0 = arith.constant 0 : i32
    %c0_i32_1 = arith.constant 0 : i32
    return %c0_i32, %c0_i32_0 : i32, i32
  }
  func.func @transform_5(%arg0: i32) -> (i32, i32) {
    %c0_i32 = arith.constant 0 : i32
    %c0_i32_0 = arith.constant 0 : i32
    %c0_i32_1 = arith.constant 0 : i32
    return %c0_i32, %c0_i32_0 : i32, i32
  }
  func.func @transform_6(%arg0: i32) -> (i32, i32) {
    %c0_i32 = arith.constant 0 : i32
    %c0_i32_0 = arith.constant 0 : i32
    %c0_i32_1 = arith.constant 0 : i32
    return %c0_i32, %c0_i32_0 : i32, i32
  }
  func.func @transform_7(%arg0: i32) -> (i32, i32) {
    %c0_i32 = arith.constant 0 : i32
    %c0_i32_0 = arith.constant 0 : i32
    %c0_i32_1 = arith.constant 0 : i32
    return %c0_i32, %c0_i32_0 : i32, i32
  }
  func.func @transform_8(%arg0: i32) -> (i32, i32) {
    %c0_i32 = arith.constant 0 : i32
    %c0_i32_0 = arith.constant 0 : i32
    %c0_i32_1 = arith.constant 0 : i32
    return %c0_i32, %c0_i32_0 : i32, i32
  }
  func.func @transform_9(%arg0: i32) -> (i32, i32) {
    %c0_i32 = arith.constant 0 : i32
    %c0_i32_0 = arith.constant 0 : i32
    %c0_i32_1 = arith.constant 0 : i32
    return %c0_i32, %c0_i32_0 : i32, i32
  }
  func.func @transform_10(%arg0: i32) -> (i32, i32) {
    %c0_i32 = arith.constant 0 : i32
    %c0_i32_0 = arith.constant 0 : i32
    %c0_i32_1 = arith.constant 0 : i32
    return %c0_i32, %c0_i32_0 : i32, i32
  }
}

</mosaic_0001>

<llo_original>
// kernel: tpu_custom_call.1
$region0: #{tpu_custom_call.1}
  #allocation0 [shape = 'u32[]', space=smem, size = 0x4, offset = 0x4, fixed_abs, tag = 'smem constant byte address 0x4 - core index']
  #allocation1 [shape = 'u32[144,128]{1,0:T(1,128)}', space=vmem, size = 0x12000, scoped, tag = 'internal scratch']
  #allocation2 [shape = 'f32[64,96]{1,0:T(8,128)}', space=vmem, size = 0x8000, scoped, tag = 'scratch operand']
  %s0 = inlined_call_operand.vmem [shape: f32[64,4], index: 0, kind: input, shape index: {}]
  %s1 = inlined_call_operand.vmem [shape: f32[64,32], index: 1, kind: input, shape index: {}]
  %s2 = inlined_call_operand.vmem [shape: f32[8,32], index: 2, kind: input, shape index: {}]
  %s3 = inlined_call_operand.vmem [shape: f32[4,96], index: 3, kind: input, shape index: {}]
  %s4 = inlined_call_operand.vmem [shape: f32[1,96], index: 4, kind: input, shape index: {}]
  %s5 = inlined_call_operand.vmem [shape: f32[32,64], index: 5, kind: input, shape index: {}]
  %s6 = inlined_call_operand.vmem [shape: f32[32,32], index: 6, kind: input, shape index: {}]
  %s7 = inlined_call_operand.vmem [shape: f32[32,2], index: 7, kind: input, shape index: {}]
  %s8 = inlined_call_operand.vmem [shape: f32[1,2], index: 8, kind: input, shape index: {}]
  %s9 = inlined_call_operand.vmem [shape: f32[64,32], index: 9, kind: output, shape index: {0}]
  %s10 = inlined_call_operand.vmem [shape: f32[64,2], index: 10, kind: output, shape index: {1}]
  %11 = xla_tuple %s9, %s10
  %s12 = sld [smem:[#allocation0]]
  $region54: #{tpu_custom_call.1} parent=0
    _
  %s14 = ssub.s32 1, %s12
  %s15 = scalar_select 0, %s14, %s12
  // Predicated region
  $region2: #{tpu_custom_call.1} parent=0 // pred_check
    _
  $region3: #{tpu_custom_call.1} parent=0 // pred_check_branch
    %17 = sbr.rel (0) target = $region5
  $region4: #{tpu_custom_call.1} parent=0 // pred_region
    _
  $region5: #{tpu_custom_call.1} parent=0 // pred_fallthru
    _
  // Predicated region
  $region6: #{tpu_custom_call.1} parent=0 // pred_check
    _
  $region7: #{tpu_custom_call.1} parent=0 // pred_check_branch
    %19 = sbr.rel (0) target = $region9
  $region8: #{tpu_custom_call.1} parent=0 // pred_region
    _
  $region9: #{tpu_custom_call.1} parent=0 // pred_fallthru
    _
  // Predicated region
  $region10: #{tpu_custom_call.1} parent=0 // pred_check
    _
  $region11: #{tpu_custom_call.1} parent=0 // pred_check_branch
    %21 = sbr.rel (0) target = $region13
  $region12: #{tpu_custom_call.1} parent=0 // pred_region
    _
  $region13: #{tpu_custom_call.1} parent=0 // pred_fallthru
    _
  // Predicated region
  $region14: #{tpu_custom_call.1} parent=0 // pred_check
    _
  $region15: #{tpu_custom_call.1} parent=0 // pred_check_branch
    %23 = sbr.rel (0) target = $region17
  $region16: #{tpu_custom_call.1} parent=0 // pred_region
    _
  $region17: #{tpu_custom_call.1} parent=0 // pred_fallthru
    _
  // Predicated region
  $region18: #{tpu_custom_call.1} parent=0 // pred_check
    _
  $region19: #{tpu_custom_call.1} parent=0 // pred_check_branch
    %25 = sbr.rel (0) target = $region21
  $region20: #{tpu_custom_call.1} parent=0 // pred_region
    _
  $region21: #{tpu_custom_call.1} parent=0 // pred_fallthru
    _
  // Predicated region
  $region22: #{tpu_custom_call.1} parent=0 // pred_check
    _
  $region23: #{tpu_custom_call.1} parent=0 // pred_check_branch
    %27 = sbr.rel (0) target = $region25
  $region24: #{tpu_custom_call.1} parent=0 // pred_region
    _
  $region25: #{tpu_custom_call.1} parent=0 // pred_fallthru
    _
  // Predicated region
  $region26: #{tpu_custom_call.1} parent=0 // pred_check
    _
  $region27: #{tpu_custom_call.1} parent=0 // pred_check_branch
    %29 = sbr.rel (0) target = $region29
  $region28: #{tpu_custom_call.1} parent=0 // pred_region
    _
  $region29: #{tpu_custom_call.1} parent=0 // pred_fallthru
    _
  // Predicated region
  $region30: #{tpu_custom_call.1} parent=0 // pred_check
    _
  $region31: #{tpu_custom_call.1} parent=0 // pred_check_branch
    %31 = sbr.rel (0) target = $region33
  $region32: #{tpu_custom_call.1} parent=0 // pred_region
    _
  $region33: #{tpu_custom_call.1} parent=0 // pred_fallthru
    _
  // Predicated region
  $region34: #{tpu_custom_call.1} parent=0 // pred_check
    _
  $region35: #{tpu_custom_call.1} parent=0 // pred_check_branch
    %33 = sbr.rel (0) target = $region37
  $region36: #{tpu_custom_call.1} parent=0 // pred_region
    _
  $region37: #{tpu_custom_call.1} parent=0 // pred_fallthru
    _
  %v34 = vld [vmem:[%s0] sm:$0xff]
  %v35 = vld [vmem:[%s0 + $0x8] sm:$0xff]
  %v36 = vld [vmem:[%s0 + $0x10] sm:$0xff]
  %v37 = vld [vmem:[%s0 + $0x18] sm:$0xff]
  %v38 = vld [vmem:[%s0 + $0x20] sm:$0xff]
  %v39 = vld [vmem:[%s0 + $0x28] sm:$0xff]
  %v40 = vld [vmem:[%s0 + $0x30] sm:$0xff]
  %v41 = vld [vmem:[%s0 + $0x38] sm:$0xff]
  %v42 = vld [vmem:[%s3] sm:$0xf]
  %v43 = vld [vmem:[%s4] sm:$0x1]
  %v45 = vlaneseq
  %v46 = vshrl.u32 %v45, 7
  %v47 = vsub.s32 0, %v46
  %v48 = vrot.slane %v43, %v47
  %vm50 = vcmask 31744
  %v52 = vsel %vm50, %v34, 0
  %v55 = vsel %vm50, %v35, 0
  %v58 = vsel %vm50, %v36, 0
  %v61 = vsel %vm50, %v37, 0
  %v64 = vsel %vm50, %v38, 0
  %v67 = vsel %vm50, %v39, 0
  %v70 = vsel %vm50, %v40, 0
  %v73 = vsel %vm50, %v41, 0
  %vm75 = vcmask 1043456
  %v77 = vsel %vm75, %v42, 0
  %79 = vmatprep.subr.mxu0 0.0
  %80 = vmatpush1.msra.mxu0 0.0
  %81 = vmatprep.subr.mxu0 0.0
  %82 = vmatpush1.msra.mxu0 0.0
  %83 = vmatprep.subr.mxu0 0.0
  %84 = vmatpush1.msra.mxu0 0.0
  %85 = vmatprep.subr.mxu0 0.0
  %86 = vmatpush1.msra.mxu0 0.0
  %87 = vmatprep.subr.mxu0 0.0
  %88 = vmatpush1.msra.mxu0 0.0
  %89 = vmatprep.subr.mxu0 0.0
  %90 = vmatpush1.msra.mxu0 0.0
  %91 = vmatprep.subr.mxu0 0.0
  %92 = vmatpush1.msra.mxu0 0.0
  %93 = vmatprep.subr.mxu0 0.0
  %94 = vmatpush1.msra.mxu0 0.0
  %95 = vmatprep.subr.mxu0 0.0
  %96 = vmatpush1.msra.mxu0 0.0
  %97 = vmatprep.subr.mxu0 0.0
  %98 = vmatpush1.msra.mxu0 0.0
  %99 = vmatprep.subr.mxu0 0.0
  %100 = vmatpush1.msra.mxu0 0.0
  %101 = vmatprep.subr.mxu0 0.0
  %102 = vmatpush1.msra.mxu0 0.0
  %103 = vmatprep.subr.mxu0 0.0
  %104 = vmatpush1.msra.mxu0 0.0
  %105 = vmatprep.subr.mxu0 0.0
  %106 = vmatpush1.msra.mxu0 0.0
  %107 = vmatprep.subr.mxu0 0.0
  %108 = vmatpush1.msra.mxu0 0.0
  %109 = vmatprep.subr.mxu0 0.0
  %110 = vmatpush1.msra.mxu0 %v77
  %111 = vmatprep.subr.mxu0 0.0
  %112 = vmatpush2.msra.mxu0 0.0
  %113 = vmatprep.subr.mxu0 0.0
  %114 = vmatpush2.msra.mxu0 0.0
  %115 = vmatprep.subr.mxu0 0.0
  %116 = vmatpush2.msra.mxu0 0.0
  %117 = vmatprep.subr.mxu0 0.0
  %118 = vmatpush2.msra.mxu0 0.0
  %119 = vmatprep.subr.mxu0 0.0
  %120 = vmatpush2.msra.mxu0 0.0
  %121 = vmatprep.subr.mxu0 0.0
  %122 = vmatpush2.msra.mxu0 0.0
  %123 = vmatprep.subr.mxu0 0.0
  %124 = vmatpush2.msra.mxu0 0.0
  %125 = vmatprep.subr.mxu0 0.0
  %126 = vmatpush2.msra.mxu0 0.0
  %127 = vmatprep.subr.mxu0 0.0
  %128 = vmatpush2.msra.mxu0 0.0
  %129 = vmatprep.subr.mxu0 0.0
  %130 = vmatpush2.msra.mxu0 0.0
  %131 = vmatprep.subr.mxu0 0.0
  %132 = vmatpush2.msra.mxu0 0.0
  %133 = vmatprep.subr.mxu0 0.0
  %134 = vmatpush2.msra.mxu0 0.0
  %135 = vmatprep.subr.mxu0 0.0
  %136 = vmatpush2.msra.mxu0 0.0
  %137 = vmatprep.subr.mxu0 0.0
  %138 = vmatpush2.msra.mxu0 0.0
  %139 = vmatprep.subr.mxu0 0.0
  %140 = vmatpush2.msra.mxu0 0.0
  %141 = vmatprep.subr.mxu0 0.0
  %142 = vmatpush2.msra.mxu0 0.0
  %143 = vmatprep.mubr.f32.mxu0 0.0
  %144 = vmatmul.mubr.f32.gmra.mxu0 %v52
  %v145 = vpop.f32.mrf.mxu0
  %v146 = vadd.f32 %v48, %v145
  %v147 = vpop.f32.mrf.mxu0
  %148 = vmatprep.mubr.f32.mxu0 0.0
  %149 = vmatmul.mubr.f32.gmra.mxu0 %v55
  %v150 = vpop.f32.mrf.mxu0
  %v151 = vadd.f32 %v48, %v150
  %v152 = vpop.f32.mrf.mxu0
  %153 = vmatprep.mubr.f32.mxu0 0.0
  %154 = vmatmul.mubr.f32.gmra.mxu0 %v58
  %v155 = vpop.f32.mrf.mxu0
  %v156 = vadd.f32 %v48, %v155
  %v157 = vpop.f32.mrf.mxu0
  %158 = vmatprep.mubr.f32.mxu0 0.0
  %159 = vmatmul.mubr.f32.gmra.mxu0 %v61
  %v160 = vpop.f32.mrf.mxu0
  %v161 = vadd.f32 %v48, %v160
  %v162 = vpop.f32.mrf.mxu0
  %163 = vmatprep.mubr.f32.mxu0 0.0
  %164 = vmatmul.mubr.f32.gmra.mxu0 %v64
  %v165 = vpop.f32.mrf.mxu0
  %v166 = vadd.f32 %v48, %v165
  %v167 = vpop.f32.mrf.mxu0
  %168 = vmatprep.mubr.f32.mxu0 0.0
  %169 = vmatmul.mubr.f32.gmra.mxu0 %v67
  %v170 = vpop.f32.mrf.mxu0
  %v171 = vadd.f32 %v48, %v170
  %v172 = vpop.f32.mrf.mxu0
  %173 = vmatprep.mubr.f32.mxu0 0.0
  %174 = vmatmul.mubr.f32.gmra.mxu0 %v70
  %v175 = vpop.f32.mrf.mxu0
  %v176 = vadd.f32 %v48, %v175
  %v177 = vpop.f32.mrf.mxu0
  %178 = vmatprep.mubr.f32.mxu0 0.0
  %179 = vmatmul.mubr.f32.gmra.mxu0 %v73
  %v180 = vpop.f32.mrf.mxu0
  %v181 = vadd.f32 %v48, %v180
  %v182 = vpop.f32.mrf.mxu0
  %183 = vdwg.mxu0
  %vm184 = vcmask 785408
  %185 = vst.msk [vmem:[#allocation2] sm:$0xff] %vm184, %v146
  %186 = vst.msk [vmem:[#allocation2 + $0x8] sm:$0xff] %vm184, %v151
  %187 = vst.msk [vmem:[#allocation2 + $0x10] sm:$0xff] %vm184, %v156
  %188 = vst.msk [vmem:[#allocation2 + $0x18] sm:$0xff] %vm184, %v161
  %189 = vst.msk [vmem:[#allocation2 + $0x20] sm:$0xff] %vm184, %v166
  %190 = vst.msk [vmem:[#allocation2 + $0x28] sm:$0xff] %vm184, %v171
  %191 = vst.msk [vmem:[#allocation2 + $0x30] sm:$0xff] %vm184, %v176
  %192 = vst.msk [vmem:[#allocation2 + $0x38] sm:$0xff] %vm184, %v181
  %v193 = vld [vmem:[%s2] sm:$0xff]
  %v194 = vld [vmem:[#allocation2] sm:$0xff]
  %v195 = vld [vmem:[%s5] sm:$0xff]
  %v196 = vld [vmem:[%s5 + $0x8] sm:$0xff]
  %v197 = vld [vmem:[%s5 + $0x10] sm:$0xff]
  %v198 = vld [vmem:[%s5 + $0x18] sm:$0xff]
  %vm199 = vcmask 261120
  %v201 = vsel %vm199, %v193, 0
  %203 = vmatprep.subr.mxu0 0.0
  %204 = vmatpush1.msra.mxu0 0.0
  %205 = vmatprep.subr.mxu0 0.0
  %206 = vmatpush1.msra.mxu0 0.0
  %207 = vmatprep.subr.mxu0 0.0
  %208 = vmatpush1.msra.mxu0 0.0
  %209 = vmatprep.subr.mxu0 0.0
  %210 = vmatpush1.msra.mxu0 0.0
  %211 = vmatprep.subr.mxu0 0.0
  %212 = vmatpush1.msra.mxu0 0.0
  %213 = vmatprep.subr.mxu0 0.0
  %214 = vmatpush1.msra.mxu0 0.0
  %215 = vmatprep.subr.mxu0 0.0
  %216 = vmatpush1.msra.mxu0 0.0
  %217 = vmatprep.subr.mxu0 0.0
  %218 = vmatpush1.msra.mxu0 0.0
  %219 = vmatprep.subr.mxu0 0.0
  %220 = vmatpush1.msra.mxu0 0.0
  %221 = vmatprep.subr.mxu0 0.0
  %222 = vmatpush1.msra.mxu0 0.0
  %223 = vmatprep.subr.mxu0 0.0
  %224 = vmatpush1.msra.mxu0 0.0
  %225 = vmatprep.subr.mxu0 0.0
  %226 = vmatpush1.msra.mxu0 0.0
  %227 = vmatprep.subr.mxu0 0.0
  %228 = vmatpush1.msra.mxu0 %v198
  %229 = vmatprep.subr.mxu0 0.0
  %230 = vmatpush1.msra.mxu0 %v197
  %231 = vmatprep.subr.mxu0 0.0
  %232 = vmatpush1.msra.mxu0 %v196
  %233 = vmatprep.subr.mxu0 0.0
  %234 = vmatpush1.msra.mxu0 %v195
  %235 = vmatprep.subr.mxu0 0.0
  %236 = vmatpush2.msra.mxu0 0.0
  %237 = vmatprep.subr.mxu0 0.0
  %238 = vmatpush2.msra.mxu0 0.0
  %239 = vmatprep.subr.mxu0 0.0
  %240 = vmatpush2.msra.mxu0 0.0
  %241 = vmatprep.subr.mxu0 0.0
  %242 = vmatpush2.msra.mxu0 0.0
  %243 = vmatprep.subr.mxu0 0.0
  %244 = vmatpush2.msra.mxu0 0.0
  %245 = vmatprep.subr.mxu0 0.0
  %246 = vmatpush2.msra.mxu0 0.0
  %247 = vmatprep.subr.mxu0 0.0
  %248 = vmatpush2.msra.mxu0 0.0
  %249 = vmatprep.subr.mxu0 0.0
  %250 = vmatpush2.msra.mxu0 0.0
  %251 = vmatprep.subr.mxu0 0.0
  %252 = vmatpush2.msra.mxu0 0.0
  %253 = vmatprep.subr.mxu0 0.0
  %254 = vmatpush2.msra.mxu0 0.0
  %255 = vmatprep.subr.mxu0 0.0
  %256 = vmatpush2.msra.mxu0 0.0
  %257 = vmatprep.subr.mxu0 0.0
  %258 = vmatpush2.msra.mxu0 0.0
  %259 = vmatprep.subr.mxu0 0.0
  %260 = vmatpush2.msra.mxu0 0.0
  %261 = vmatprep.subr.mxu0 0.0
  %262 = vmatpush2.msra.mxu0 0.0
  %263 = vmatprep.subr.mxu0 0.0
  %264 = vmatpush2.msra.mxu0 0.0
  %265 = vmatprep.subr.mxu0 0.0
  %266 = vmatpush2.msra.mxu0 0.0
  %267 = vmatprep.mubr.f32.mxu0 0.0
  %268 = vmatmul.mubr.f32.gmra.mxu0 %v201
  %v269 = vpop.f32.mrf.mxu0
  %v270 = vadd.f32 0.0, %v269
  %v271 = vpop.f32.mrf.mxu0
  %272 = vdwg.mxu0
  %v273 = vadd.f32 %v194, %v270
  %v274 = vxor.u32 %v273, 2147483648
  %v275 = vmul.f32 %v274, 1.442695
  %v276 = vpow.pop %v275
  %v277 = vadd.f32 %v276, 1.0
  %v278 = vrcp.pop %v277
  %v279 = vmul.f32 1.0, %v278
  %v280 = vmul.f32 %v279, %v193
  %v281 = vld [vmem:[%s6] sm:$0xff]
  %v282 = vld [vmem:[%s6 + $0x8] sm:$0xff]
  %v283 = vld [vmem:[%s6 + $0x10] sm:$0xff]
  %v284 = vld [vmem:[%s6 + $0x18] sm:$0xff]
  %v286 = vsel %vm199, %v280, 0
  %288 = vmatprep.subr.mxu0 0.0
  %289 = vmatpush1.msra.mxu0 0.0
  %290 = vmatprep.subr.mxu0 0.0
  %291 = vmatpush1.msra.mxu0 0.0
  %292 = vmatprep.subr.mxu0 0.0
  %293 = vmatpush1.msra.mxu0 0.0
  %294 = vmatprep.subr.mxu0 0.0
  %295 = vmatpush1.msra.mxu0 0.0
  %296 = vmatprep.subr.mxu0 0.0
  %297 = vmatpush1.msra.mxu0 0.0
  %298 = vmatprep.subr.mxu0 0.0
  %299 = vmatpush1.msra.mxu0 0.0
  %300 = vmatprep.subr.mxu0 0.0
  %301 = vmatpush1.msra.mxu0 0.0
  %302 = vmatprep.subr.mxu0 0.0
  %303 = vmatpush1.msra.mxu0 0.0
  %304 = vmatprep.subr.mxu0 0.0
  %305 = vmatpush1.msra.mxu0 0.0
  %306 = vmatprep.subr.mxu0 0.0
  %307 = vmatpush1.msra.mxu0 0.0
  %308 = vmatprep.subr.mxu0 0.0
  %309 = vmatpush1.msra.mxu0 0.0
  %310 = vmatprep.subr.mxu0 0.0
  %311 = vmatpush1.msra.mxu0 0.0
  %312 = vmatprep.subr.mxu0 0.0
  %313 = vmatpush1.msra.mxu0 %v284
  %314 = vmatprep.subr.mxu0 0.0
  %315 = vmatpush1.msra.mxu0 %v283
  %316 = vmatprep.subr.mxu0 0.0
  %317 = vmatpush1.msra.mxu0 %v282
  %318 = vmatprep.subr.mxu0 0.0
  %319 = vmatpush1.msra.mxu0 %v281
  %320 = vmatprep.subr.mxu0 0.0
  %321 = vmatpush2.msra.mxu0 0.0
  %322 = vmatprep.subr.mxu0 0.0
  %323 = vmatpush2.msra.mxu0 0.0
  %324 = vmatprep.subr.mxu0 0.0
  %325 = vmatpush2.msra.mxu0 0.0
  %326 = vmatprep.subr.mxu0 0.0
  %327 = vmatpush2.msra.mxu0 0.0
  %328 = vmatprep.subr.mxu0 0.0
  %329 = vmatpush2.msra.mxu0 0.0
  %330 = vmatprep.subr.mxu0 0.0
  %331 = vmatpush2.msra.mxu0 0.0
  %332 = vmatprep.subr.mxu0 0.0
  %333 = vmatpush2.msra.mxu0 0.0
  %334 = vmatprep.subr.mxu0 0.0
  %335 = vmatpush2.msra.mxu0 0.0
  %336 = vmatprep.subr.mxu0 0.0
  %337 = vmatpush2.msra.mxu0 0.0
  %338 = vmatprep.subr.mxu0 0.0
  %339 = vmatpush2.msra.mxu0 0.0
  %340 = vmatprep.subr.mxu0 0.0
  %341 = vmatpush2.msra.mxu0 0.0
  %342 = vmatprep.subr.mxu0 0.0
  %343 = vmatpush2.msra.mxu0 0.0
  %344 = vmatprep.subr.mxu0 0.0
  %345 = vmatpush2.msra.mxu0 0.0
  %346 = vmatprep.subr.mxu0 0.0
  %347 = vmatpush2.msra.mxu0 0.0
  %348 = vmatprep.subr.mxu0 0.0
  %349 = vmatpush2.msra.mxu0 0.0
  %350 = vmatprep.subr.mxu0 0.0
  %351 = vmatpush2.msra.mxu0 0.0
  %352 = vmatprep.mubr.f32.mxu0 0.0
  %353 = vmatmul.mubr.f32.gmra.mxu0 %v286
  %v354 = vpop.f32.mrf.mxu0
  %v355 = vadd.f32 0.0, %v354
  %v356 = vpop.f32.mrf.mxu0
  %357 = vdwg.mxu0
  %359 = vrot.lane.b32.xlu0 %v355, 64
  %v360 = vpop.permute.xlu0 %359
  %v362 = vadd.f32 %v194, %v360
  %v363 = vtanh.pop %v362
  %v364 = vsub.f32 1.0, %v279
  %366 = vrot.lane.b32.xlu0 %v363, 96
  %v367 = vpop.permute.xlu0 %366
  %v369 = vmul.f32 %v364, %v367
  %370 = vrot.lane.b32.xlu0 %v193, 32
  %v371 = vpop.permute.xlu0 %370
  %v373 = vmul.f32 %v279, %v371
  %v374 = vadd.f32 %v369, %v373
  %v375 = vld [vmem:[%s1] sm:$0xff]
  %v376 = vmul.f32 %v193, 0.8
  %v377 = vmul.f32 %v374, 0.2
  %379 = vrot.lane.b32.xlu0 %v377, 96
  %v380 = vpop.permute.xlu0 %379
  %v382 = vadd.f32 %v376, %v380
  %v383 = vadd.f32 %v382, %v375
  %384 = vst.msk [vmem:[%s9] sm:$0xff] %vm199, %v383
  %s385 = scalar_lea.vmem [#allocation2], 8
  %v386 = vld [vmem:[%s385] sm:$0xff]
  %v387 = vld [vmem:[%s5] sm:$0xff]
  %v388 = vld [vmem:[%s5 + $0x8] sm:$0xff]
  %v389 = vld [vmem:[%s5 + $0x10] sm:$0xff]
  %v390 = vld [vmem:[%s5 + $0x18] sm:$0xff]
  %v392 = vsel %vm199, %v383, 0
  %394 = vmatprep.subr.mxu0 0.0
  %395 = vmatpush1.msra.mxu0 0.0
  %396 = vmatprep.subr.mxu0 0.0
  %397 = vmatpush1.msra.mxu0 0.0
  %398 = vmatprep.subr.mxu0 0.0
  %399 = vmatpush1.msra.mxu0 0.0
  %400 = vmatprep.subr.mxu0 0.0
  %401 = vmatpush1.msra.mxu0 0.0
  %402 = vmatprep.subr.mxu0 0.0
  %403 = vmatpush1.msra.mxu0 0.0
  %404 = vmatprep.subr.mxu0 0.0
  %405 = vmatpush1.msra.mxu0 0.0
  %406 = vmatprep.subr.mxu0 0.0
  %407 = vmatpush1.msra.mxu0 0.0
  %408 = vmatprep.subr.mxu0 0.0
  %409 = vmatpush1.msra.mxu0 0.0
  %410 = vmatprep.subr.mxu0 0.0
  %411 = vmatpush1.msra.mxu0 0.0
  %412 = vmatprep.subr.mxu0 0.0
  %413 = vmatpush1.msra.mxu0 0.0
  %414 = vmatprep.subr.mxu0 0.0
  %415 = vmatpush1.msra.mxu0 0.0
  %416 = vmatprep.subr.mxu0 0.0
  %417 = vmatpush1.msra.mxu0 0.0
  %418 = vmatprep.subr.mxu0 0.0
  %419 = vmatpush1.msra.mxu0 %v390
  %420 = vmatprep.subr.mxu0 0.0
  %421 = vmatpush1.msra.mxu0 %v389
  %422 = vmatprep.subr.mxu0 0.0
  %423 = vmatpush1.msra.mxu0 %v388
  %424 = vmatprep.subr.mxu0 0.0
  %425 = vmatpush1.msra.mxu0 %v387
  %426 = vmatprep.subr.mxu0 0.0
  %427 = vmatpush2.msra.mxu0 0.0
  %428 = vmatprep.subr.mxu0 0.0
  %429 = vmatpush2.msra.mxu0 0.0
  %430 = vmatprep.subr.mxu0 0.0
  %431 = vmatpush2.msra.mxu0 0.0
  %432 = vmatprep.subr.mxu0 0.0
  %433 = vmatpush2.msra.mxu0 0.0
  %434 = vmatprep.subr.mxu0 0.0
  %435 = vmatpush2.msra.mxu0 0.0
  %436 = vmatprep.subr.mxu0 0.0
  %437 = vmatpush2.msra.mxu0 0.0
  %438 = vmatprep.subr.mxu0 0.0
  %439 = vmatpush2.msra.mxu0 0.0
  %440 = vmatprep.subr.mxu0 0.0
  %441 = vmatpush2.msra.mxu0 0.0
  %442 = vmatprep.subr.mxu0 0.0
  %443 = vmatpush2.msra.mxu0 0.0
  %444 = vmatprep.subr.mxu0 0.0
  %445 = vmatpush2.msra.mxu0 0.0
  %446 = vmatprep.subr.mxu0 0.0
  %447 = vmatpush2.msra.mxu0 0.0
  %448 = vmatprep.subr.mxu0 0.0
  %449 = vmatpush2.msra.mxu0 0.0
  %450 = vmatprep.subr.mxu0 0.0
  %451 = vmatpush2.msra.mxu0 0.0
  %452 = vmatprep.subr.mxu0 0.0
  %453 = vmatpush2.msra.mxu0 0.0
  %454 = vmatprep.subr.mxu0 0.0
  %455 = vmatpush2.msra.mxu0 0.0
  %456 = vmatprep.subr.mxu0 0.0
  %457 = vmatpush2.msra.mxu0 0.0
  %458 = vmatprep.mubr.f32.mxu0 0.0
  %459 = vmatmul.mubr.f32.gmra.mxu0 %v392
  %v460 = vpop.f32.mrf.mxu0
  %v461 = vadd.f32 0.0, %v460
  %v462 = vpop.f32.mrf.mxu0
  %463 = vdwg.mxu0
  %v464 = vadd.f32 %v386, %v461
  %v465 = vxor.u32 %v464, 2147483648
  %v466 = vmul.f32 %v465, 1.442695
  %v467 = vpow.pop %v466
  %v468 = vadd.f32 %v467, 1.0
  %v469 = vrcp.pop %v468
  %v470 = vmul.f32 1.0, %v469
  %v471 = vmul.f32 %v470, %v383
  %v472 = vld [vmem:[%s6] sm:$0xff]
  %v473 = vld [vmem:[%s6 + $0x8] sm:$0xff]
  %v474 = vld [vmem:[%s6 + $0x10] sm:$0xff]
  %v475 = vld [vmem:[%s6 + $0x18] sm:$0xff]
  %v477 = vsel %vm199, %v471, 0
  %479 = vmatprep.subr.mxu0 0.0
  %480 = vmatpush1.msra.mxu0 0.0
  %481 = vmatprep.subr.mxu0 0.0
  %482 = vmatpush1.msra.mxu0 0.0
  %483 = vmatprep.subr.mxu0 0.0
  %484 = vmatpush1.msra.mxu0 0.0
  %485 = vmatprep.subr.mxu0 0.0
  %486 = vmatpush1.msra.mxu0 0.0
  %487 = vmatprep.subr.mxu0 0.0
  %488 = vmatpush1.msra.mxu0 0.0
  %489 = vmatprep.subr.mxu0 0.0
  %490 = vmatpush1.msra.mxu0 0.0
  %491 = vmatprep.subr.mxu0 0.0
  %492 = vmatpush1.msra.mxu0 0.0
  %493 = vmatprep.subr.mxu0 0.0
  %494 = vmatpush1.msra.mxu0 0.0
  %495 = vmatprep.subr.mxu0 0.0
  %496 = vmatpush1.msra.mxu0 0.0
  %497 = vmatprep.subr.mxu0 0.0
  %498 = vmatpush1.msra.mxu0 0.0
  %499 = vmatprep.subr.mxu0 0.0
  %500 = vmatpush1.msra.mxu0 0.0
  %501 = vmatprep.subr.mxu0 0.0
  %502 = vmatpush1.msra.mxu0 0.0
  %503 = vmatprep.subr.mxu0 0.0
  %504 = vmatpush1.msra.mxu0 %v475
  %505 = vmatprep.subr.mxu0 0.0
  %506 = vmatpush1.msra.mxu0 %v474
  %507 = vmatprep.subr.mxu0 0.0
  %508 = vmatpush1.msra.mxu0 %v473
  %509 = vmatprep.subr.mxu0 0.0
  %510 = vmatpush1.msra.mxu0 %v472
  %511 = vmatprep.subr.mxu0 0.0
  %512 = vmatpush2.msra.mxu0 0.0
  %513 = vmatprep.subr.mxu0 0.0
  %514 = vmatpush2.msra.mxu0 0.0
  %515 = vmatprep.subr.mxu0 0.0
  %516 = vmatpush2.msra.mxu0 0.0
  %517 = vmatprep.subr.mxu0 0.0
  %518 = vmatpush2.msra.mxu0 0.0
  %519 = vmatprep.subr.mxu0 0.0
  %520 = vmatpush2.msra.mxu0 0.0
  %521 = vmatprep.subr.mxu0 0.0
  %522 = vmatpush2.msra.mxu0 0.0
  %523 = vmatprep.subr.mxu0 0.0
  %524 = vmatpush2.msra.mxu0 0.0
  %525 = vmatprep.subr.mxu0 0.0
  %526 = vmatpush2.msra.mxu0 0.0
  %527 = vmatprep.subr.mxu0 0.0
  %528 = vmatpush2.msra.mxu0 0.0
  %529 = vmatprep.subr.mxu0 0.0
  %530 = vmatpush2.msra.mxu0 0.0
  %531 = vmatprep.subr.mxu0 0.0
  %532 = vmatpush2.msra.mxu0 0.0
  %533 = vmatprep.subr.mxu0 0.0
  %534 = vmatpush2.msra.mxu0 0.0
  %535 = vmatprep.subr.mxu0 0.0
  %536 = vmatpush2.msra.mxu0 0.0
  %537 = vmatprep.subr.mxu0 0.0
  %538 = vmatpush2.msra.mxu0 0.0
  %539 = vmatprep.subr.mxu0 0.0
  %540 = vmatpush2.msra.mxu0 0.0
  %541 = vmatprep.subr.mxu0 0.0
  %542 = vmatpush2.msra.mxu0 0.0
  %543 = vmatprep.mubr.f32.mxu0 0.0
  %544 = vmatmul.mubr.f32.gmra.mxu0 %v477
  %v545 = vpop.f32.mrf.mxu0
  %v546 = vadd.f32 0.0, %v545
  %v547 = vpop.f32.mrf.mxu0
  %548 = vdwg.mxu0
  %550 = vrot.lane.b32.xlu0 %v546, 64
  %v551 = vpop.permute.xlu0 %550
  %v553 = vadd.f32 %v386, %v551
  %v554 = vtanh.pop %v553
  %v555 = vsub.f32 1.0, %v470
  %557 = vrot.lane.b32.xlu0 %v554, 96
  %v558 = vpop.permute.xlu0 %557
  %v560 = vmul.f32 %v555, %v558
  %561 = vrot.lane.b32.xlu0 %v383, 32
  %v562 = vpop.permute.xlu0 %561
  %v564 = vmul.f32 %v470, %v562
  %v565 = vadd.f32 %v560, %v564
  %s566 = scalar_lea.vmem %s1, 8
  %v567 = vld [vmem:[%s566] sm:$0xff]
  %v568 = vmul.f32 %v383, 0.8
  %v569 = vmul.f32 %v565, 0.2
  %571 = vrot.lane.b32.xlu0 %v569, 96
  %v572 = vpop.permute.xlu0 %571
  %v574 = vadd.f32 %v568, %v572
  %v575 = vadd.f32 %v574, %v567
  %s576 = scalar_lea.vmem %s9, 8
  %577 = vst.msk [vmem:[%s576] sm:$0xff] %vm199, %v575
  %s578 = scalar_lea.vmem [#allocation2], 16
  %v579 = vld [vmem:[%s578] sm:$0xff]
  %v580 = vld [vmem:[%s5] sm:$0xff]
  %v581 = vld [vmem:[%s5 + $0x8] sm:$0xff]
  %v582 = vld [vmem:[%s5 + $0x10] sm:$0xff]
  %v583 = vld [vmem:[%s5 + $0x18] sm:$0xff]
  %v585 = vsel %vm199, %v575, 0
  %587 = vmatprep.subr.mxu0 0.0
  %588 = vmatpush1.msra.mxu0 0.0
  %589 = vmatprep.subr.mxu0 0.0
  %590 = vmatpush1.msra.mxu0 0.0
  %591 = vmatprep.subr.mxu0 0.0
  %592 = vmatpush1.msra.mxu0 0.0
  %593 = vmatprep.subr.mxu0 0.0
  %594 = vmatpush1.msra.mxu0 0.0
  %595 = vmatprep.subr.mxu0 0.0
  %596 = vmatpush1.msra.mxu0 0.0
  %597 = vmatprep.subr.mxu0 0.0
  %598 = vmatpush1.msra.mxu0 0.0
  %599 = vmatprep.subr.mxu0 0.0
  %600 = vmatpush1.msra.mxu0 0.0
  %601 = vmatprep.subr.mxu0 0.0
  %602 = vmatpush1.msra.mxu0 0.0
  %603 = vmatprep.subr.mxu0 0.0
  %604 = vmatpush1.msra.mxu0 0.0
  %605 = vmatprep.subr.mxu0 0.0
  %606 = vmatpush1.msra.mxu0 0.0
  %607 = vmatprep.subr.mxu0 0.0
  %608 = vmatpush1.msra.mxu0 0.0
  %609 = vmatprep.subr.mxu0 0.0
  %610 = vmatpush1.msra.mxu0 0.0
  %611 = vmatprep.subr.mxu0 0.0
  %612 = vmatpush1.msra.mxu0 %v583
  %613 = vmatprep.subr.mxu0 0.0
  %614 = vmatpush1.msra.mxu0 %v582
  %615 = vmatprep.subr.mxu0 0.0
  %616 = vmatpush1.msra.mxu0 %v581
  %617 = vmatprep.subr.mxu0 0.0
  %618 = vmatpush1.msra.mxu0 %v580
  %619 = vmatprep.subr.mxu0 0.0
  %620 = vmatpush2.msra.mxu0 0.0
  %621 = vmatprep.subr.mxu0 0.0
  %622 = vmatpush2.msra.mxu0 0.0
  %623 = vmatprep.subr.mxu0 0.0
  %624 = vmatpush2.msra.mxu0 0.0
  %625 = vmatprep.subr.mxu0 0.0
  %626 = vmatpush2.msra.mxu0 0.0
  %627 = vmatprep.subr.mxu0 0.0
  %628 = vmatpush2.msra.mxu0 0.0
  %629 = vmatprep.subr.mxu0 0.0
  %630 = vmatpush2.msra.mxu0 0.0
  %631 = vmatprep.subr.mxu0 0.0
  %632 = vmatpush2.msra.mxu0 0.0
  %633 = vmatprep.subr.mxu0 0.0
  %634 = vmatpush2.msra.mxu0 0.0
  %635 = vmatprep.subr.mxu0 0.0
  %636 = vmatpush2.msra.mxu0 0.0
  %637 = vmatprep.subr.mxu0 0.0
  %638 = vmatpush2.msra.mxu0 0.0
  %639 = vmatprep.subr.mxu0 0.0
  %640 = vmatpush2.msra.mxu0 0.0
  %641 = vmatprep.subr.mxu0 0.0
  %642 = vmatpush2.msra.mxu0 0.0
  %643 = vmatprep.subr.mxu0 0.0
  %644 = vmatpush2.msra.mxu0 0.0
  %645 = vmatprep.subr.mxu0 0.0
  %646 = vmatpush2.msra.mxu0 0.0
  %647 = vmatprep.subr.mxu0 0.0
  %648 = vmatpush2.msra.mxu0 0.0
  %649 = vmatprep.subr.mxu0 0.0
  %650 = vmatpush2.msra.mxu0 0.0
  %651 = vmatprep.mubr.f32.mxu0 0.0
  %652 = vmatmul.mubr.f32.gmra.mxu0 %v585
  %v653 = vpop.f32.mrf.mxu0
  %v654 = vadd.f32 0.0, %v653
  %v655 = vpop.f32.mrf.mxu0
  %656 = vdwg.mxu0
  %v657 = vadd.f32 %v579, %v654
  %v658 = vxor.u32 %v657, 2147483648
  %v659 = vmul.f32 %v658, 1.442695
  %v660 = vpow.pop %v659
  %v661 = vadd.f32 %v660, 1.0
  %v662 = vrcp.pop %v661
  %v663 = vmul.f32 1.0, %v662
  %v664 = vmul.f32 %v663, %v575
  %v665 = vld [vmem:[%s6] sm:$0xff]
  %v666 = vld [vmem:[%s6 + $0x8] sm:$0xff]
  %v667 = vld [vmem:[%s6 + $0x10] sm:$0xff]
  %v668 = vld [vmem:[%s6 + $0x18] sm:$0xff]
  %v670 = vsel %vm199, %v664, 0
  %672 = vmatprep.subr.mxu0 0.0
  %673 = vmatpush1.msra.mxu0 0.0
  %674 = vmatprep.subr.mxu0 0.0
  %675 = vmatpush1.msra.mxu0 0.0
  %676 = vmatprep.subr.mxu0 0.0
  %677 = vmatpush1.msra.mxu0 0.0
  %678 = vmatprep.subr.mxu0 0.0
  %679 = vmatpush1.msra.mxu0 0.0
  %680 = vmatprep.subr.mxu0 0.0
  %681 = vmatpush1.msra.mxu0 0.0
  %682 = vmatprep.subr.mxu0 0.0
  %683 = vmatpush1.msra.mxu0 0.0
  %684 = vmatprep.subr.mxu0 0.0
  %685 = vmatpush1.msra.mxu0 0.0
  %686 = vmatprep.subr.mxu0 0.0
  %687 = vmatpush1.msra.mxu0 0.0
  %688 = vmatprep.subr.mxu0 0.0
  %689 = vmatpush1.msra.mxu0 0.0
  %690 = vmatprep.subr.mxu0 0.0
  %691 = vmatpush1.msra.mxu0 0.0
  %692 = vmatprep.subr.mxu0 0.0
  %693 = vmatpush1.msra.mxu0 0.0
  %694 = vmatprep.subr.mxu0 0.0
  %695 = vmatpush1.msra.mxu0 0.0
  %696 = vmatprep.subr.mxu0 0.0
  %697 = vmatpush1.msra.mxu0 %v668
  %698 = vmatprep.subr.mxu0 0.0
  %699 = vmatpush1.msra.mxu0 %v667
  %700 = vmatprep.subr.mxu0 0.0
  %701 = vmatpush1.msra.mxu0 %v666
  %702 = vmatprep.subr.mxu0 0.0
  %703 = vmatpush1.msra.mxu0 %v665
  %704 = vmatprep.subr.mxu0 0.0
  %705 = vmatpush2.msra.mxu0 0.0
  %706 = vmatprep.subr.mxu0 0.0
  %707 = vmatpush2.msra.mxu0 0.0
  %708 = vmatprep.subr.mxu0 0.0
  %709 = vmatpush2.msra.mxu0 0.0
  %710 = vmatprep.subr.mxu0 0.0
  %711 = vmatpush2.msra.mxu0 0.0
  %712 = vmatprep.subr.mxu0 0.0
  %713 = vmatpush2.msra.mxu0 0.0
  %714 = vmatprep.subr.mxu0 0.0
  %715 = vmatpush2.msra.mxu0 0.0
  %716 = vmatprep.subr.mxu0 0.0
  %717 = vmatpush2.msra.mxu0 0.0
  %718 = vmatprep.subr.mxu0 0.0
  %719 = vmatpush2.msra.mxu0 0.0
  %720 = vmatprep.subr.mxu0 0.0
  %721 = vmatpush2.msra.mxu0 0.0
  %722 = vmatprep.subr.mxu0 0.0
  %723 = vmatpush2.msra.mxu0 0.0
  %724 = vmatprep.subr.mxu0 0.0
  %725 = vmatpush2.msra.mxu0 0.0
  %726 = vmatprep.subr.mxu0 0.0
  %727 = vmatpush2.msra.mxu0 0.0
  %728 = vmatprep.subr.mxu0 0.0
  %729 = vmatpush2.msra.mxu0 0.0
  %730 = vmatprep.subr.mxu0 0.0
  %731 = vmatpush2.msra.mxu0 0.0
  %732 = vmatprep.subr.mxu0 0.0
  %733 = vmatpush2.msra.mxu0 0.0
  %734 = vmatprep.subr.mxu0 0.0
  %735 = vmatpush2.msra.mxu0 0.0
  %736 = vmatprep.mubr.f32.mxu0 0.0
  %737 = vmatmul.mubr.f32.gmra.mxu0 %v670
  %v738 = vpop.f32.mrf.mxu0
  %v739 = vadd.f32 0.0, %v738
  %v740 = vpop.f32.mrf.mxu0
  %741 = vdwg.mxu0
  %743 = vrot.lane.b32.xlu0 %v739, 64
  %v744 = vpop.permute.xlu0 %743
  %v746 = vadd.f32 %v579, %v744
  %v747 = vtanh.pop %v746
  %v748 = vsub.f32 1.0, %v663
  %750 = vrot.lane.b32.xlu0 %v747, 96
  %v751 = vpop.permute.xlu0 %750
  %v753 = vmul.f32 %v748, %v751
  %754 = vrot.lane.b32.xlu0 %v575, 32
  %v755 = vpop.permute.xlu0 %754
  %v757 = vmul.f32 %v663, %v755
  %v758 = vadd.f32 %v753, %v757
  %s759 = scalar_lea.vmem %s1, 16
  %v760 = vld [vmem:[%s759] sm:$0xff]
  %v761 = vmul.f32 %v575, 0.8
  %v762 = vmul.f32 %v758, 0.2
  %764 = vrot.lane.b32.xlu0 %v762, 96
  %v765 = vpop.permute.xlu0 %764
  %v767 = vadd.f32 %v761, %v765
  %v768 = vadd.f32 %v767, %v760
  %s769 = scalar_lea.vmem %s9, 16
  %770 = vst.msk [vmem:[%s769] sm:$0xff] %vm199, %v768
  %s771 = scalar_lea.vmem [#allocation2], 24
  %v772 = vld [vmem:[%s771] sm:$0xff]
  %v773 = vld [vmem:[%s5] sm:$0xff]
  %v774 = vld [vmem:[%s5 + $0x8] sm:$0xff]
  %v775 = vld [vmem:[%s5 + $0x10] sm:$0xff]
  %v776 = vld [vmem:[%s5 + $0x18] sm:$0xff]
  %v778 = vsel %vm199, %v768, 0
  %780 = vmatprep.subr.mxu0 0.0
  %781 = vmatpush1.msra.mxu0 0.0
  %782 = vmatprep.subr.mxu0 0.0
  %783 = vmatpush1.msra.mxu0 0.0
  %784 = vmatprep.subr.mxu0 0.0
  %785 = vmatpush1.msra.mxu0 0.0
  %786 = vmatprep.subr.mxu0 0.0
  %787 = vmatpush1.msra.mxu0 0.0
  %788 = vmatprep.subr.mxu0 0.0
  %789 = vmatpush1.msra.mxu0 0.0
  %790 = vmatprep.subr.mxu0 0.0
  %791 = vmatpush1.msra.mxu0 0.0
  %792 = vmatprep.subr.mxu0 0.0
  %793 = vmatpush1.msra.mxu0 0.0
  %794 = vmatprep.subr.mxu0 0.0
  %795 = vmatpush1.msra.mxu0 0.0
  %796 = vmatprep.subr.mxu0 0.0
  %797 = vmatpush1.msra.mxu0 0.0
  %798 = vmatprep.subr.mxu0 0.0
  %799 = vmatpush1.msra.mxu0 0.0
  %800 = vmatprep.subr.mxu0 0.0
  %801 = vmatpush1.msra.mxu0 0.0
  %802 = vmatprep.subr.mxu0 0.0
  %803 = vmatpush1.msra.mxu0 0.0
  %804 = vmatprep.subr.mxu0 0.0
  %805 = vmatpush1.msra.mxu0 %v776
  %806 = vmatprep.subr.mxu0 0.0
  %807 = vmatpush1.msra.mxu0 %v775
  %808 = vmatprep.subr.mxu0 0.0
  %809 = vmatpush1.msra.mxu0 %v774
  %810 = vmatprep.subr.mxu0 0.0
  %811 = vmatpush1.msra.mxu0 %v773
  %812 = vmatprep.subr.mxu0 0.0
  %813 = vmatpush2.msra.mxu0 0.0
  %814 = vmatprep.subr.mxu0 0.0
  %815 = vmatpush2.msra.mxu0 0.0
  %816 = vmatprep.subr.mxu0 0.0
  %817 = vmatpush2.msra.mxu0 0.0
  %818 = vmatprep.subr.mxu0 0.0
  %819 = vmatpush2.msra.mxu0 0.0
  %820 = vmatprep.subr.mxu0 0.0
  %821 = vmatpush2.msra.mxu0 0.0
  %822 = vmatprep.subr.mxu0 0.0
  %823 = vmatpush2.msra.mxu0 0.0
  %824 = vmatprep.subr.mxu0 0.0
  %825 = vmatpush2.msra.mxu0 0.0
  %826 = vmatprep.subr.mxu0 0.0
  %827 = vmatpush2.msra.mxu0 0.0
  %828 = vmatprep.subr.mxu0 0.0
  %829 = vmatpush2.msra.mxu0 0.0
  %830 = vmatprep.subr.mxu0 0.0
  %831 = vmatpush2.msra.mxu0 0.0
  %832 = vmatprep.subr.mxu0 0.0
  %833 = vmatpush2.msra.mxu0 0.0
  %834 = vmatprep.subr.mxu0 0.0
  %835 = vmatpush2.msra.mxu0 0.0
  %836 = vmatprep.subr.mxu0 0.0
  %837 = vmatpush2.msra.mxu0 0.0
  %838 = vmatprep.subr.mxu0 0.0
  %839 = vmatpush2.msra.mxu0 0.0
  %840 = vmatprep.subr.mxu0 0.0
  %841 = vmatpush2.msra.mxu0 0.0
  %842 = vmatprep.subr.mxu0 0.0
  %843 = vmatpush2.msra.mxu0 0.0
  %844 = vmatprep.mubr.f32.mxu0 0.0
  %845 = vmatmul.mubr.f32.gmra.mxu0 %v778
  %v846 = vpop.f32.mrf.mxu0
  %v847 = vadd.f32 0.0, %v846
  %v848 = vpop.f32.mrf.mxu0
  %849 = vdwg.mxu0
  %v850 = vadd.f32 %v772, %v847
  %v851 = vxor.u32 %v850, 2147483648
  %v852 = vmul.f32 %v851, 1.442695
  %v853 = vpow.pop %v852
  %v854 = vadd.f32 %v853, 1.0
  %v855 = vrcp.pop %v854
  %v856 = vmul.f32 1.0, %v855
  %v857 = vmul.f32 %v856, %v768
  %v858 = vld [vmem:[%s6] sm:$0xff]
  %v859 = vld [vmem:[%s6 + $0x8] sm:$0xff]
  %v860 = vld [vmem:[%s6 + $0x10] sm:$0xff]
  %v861 = vld [vmem:[%s6 + $0x18] sm:$0xff]
  %v863 = vsel %vm199, %v857, 0
  %865 = vmatprep.subr.mxu0 0.0
  %866 = vmatpush1.msra.mxu0 0.0
  %867 = vmatprep.subr.mxu0 0.0
  %868 = vmatpush1.msra.mxu0 0.0
  %869 = vmatprep.subr.mxu0 0.0
  %870 = vmatpush1.msra.mxu0 0.0
  %871 = vmatprep.subr.mxu0 0.0
  %872 = vmatpush1.msra.mxu0 0.0
  %873 = vmatprep.subr.mxu0 0.0
  %874 = vmatpush1.msra.mxu0 0.0
  %875 = vmatprep.subr.mxu0 0.0
  %876 = vmatpush1.msra.mxu0 0.0
  %877 = vmatprep.subr.mxu0 0.0
  %878 = vmatpush1.msra.mxu0 0.0
  %879 = vmatprep.subr.mxu0 0.0
  %880 = vmatpush1.msra.mxu0 0.0
  %881 = vmatprep.subr.mxu0 0.0
  %882 = vmatpush1.msra.mxu0 0.0
  %883 = vmatprep.subr.mxu0 0.0
  %884 = vmatpush1.msra.mxu0 0.0
  %885 = vmatprep.subr.mxu0 0.0
  %886 = vmatpush1.msra.mxu0 0.0
  %887 = vmatprep.subr.mxu0 0.0
  %888 = vmatpush1.msra.mxu0 0.0
  %889 = vmatprep.subr.mxu0 0.0
  %890 = vmatpush1.msra.mxu0 %v861
  %891 = vmatprep.subr.mxu0 0.0
  %892 = vmatpush1.msra.mxu0 %v860
  %893 = vmatprep.subr.mxu0 0.0
  %894 = vmatpush1.msra.mxu0 %v859
  %895 = vmatprep.subr.mxu0 0.0
  %896 = vmatpush1.msra.mxu0 %v858
  %897 = vmatprep.subr.mxu0 0.0
  %898 = vmatpush2.msra.mxu0 0.0
  %899 = vmatprep.subr.mxu0 0.0
  %900 = vmatpush2.msra.mxu0 0.0
  %901 = vmatprep.subr.mxu0 0.0
  %902 = vmatpush2.msra.mxu0 0.0
  %903 = vmatprep.subr.mxu0 0.0
  %904 = vmatpush2.msra.mxu0 0.0
  %905 = vmatprep.subr.mxu0 0.0
  %906 = vmatpush2.msra.mxu0 0.0
  %907 = vmatprep.subr.mxu0 0.0
  %908 = vmatpush2.msra.mxu0 0.0
  %909 = vmatprep.subr.mxu0 0.0
  %910 = vmatpush2.msra.mxu0 0.0
  %911 = vmatprep.subr.mxu0 0.0
  %912 = vmatpush2.msra.mxu0 0.0
  %913 = vmatprep.subr.mxu0 0.0
  %914 = vmatpush2.msra.mxu0 0.0
  %915 = vmatprep.subr.mxu0 0.0
  %916 = vmatpush2.msra.mxu0 0.0
  %917 = vmatprep.subr.mxu0 0.0
  %918 = vmatpush2.msra.mxu0 0.0
  %919 = vmatprep.subr.mxu0 0.0
  %920 = vmatpush2.msra.mxu0 0.0
  %921 = vmatprep.subr.mxu0 0.0
  %922 = vmatpush2.msra.mxu0 0.0
  %923 = vmatprep.subr.mxu0 0.0
  %924 = vmatpush2.msra.mxu0 0.0
  %925 = vmatprep.subr.mxu0 0.0
  %926 = vmatpush2.msra.mxu0 0.0
  %927 = vmatprep.subr.mxu0 0.0
  %928 = vmatpush2.msra.mxu0 0.0
  %929 = vmatprep.mubr.f32.mxu0 0.0
  %930 = vmatmul.mubr.f32.gmra.mxu0 %v863
  %v931 = vpop.f32.mrf.mxu0
  %v932 = vadd.f32 0.0, %v931
  %v933 = vpop.f32.mrf.mxu0
  %934 = vdwg.mxu0
  %936 = vrot.lane.b32.xlu0 %v932, 64
  %v937 = vpop.permute.xlu0 %936
  %v939 = vadd.f32 %v772, %v937
  %v940 = vtanh.pop %v939
  %v941 = vsub.f32 1.0, %v856
  %943 = vrot.lane.b32.xlu0 %v940, 96
  %v944 = vpop.permute.xlu0 %943
  %v946 = vmul.f32 %v941, %v944
  %947 = vrot.lane.b32.xlu0 %v768, 32
  %v948 = vpop.permute.xlu0 %947
  %v950 = vmul.f32 %v856, %v948
  %v951 = vadd.f32 %v946, %v950
  %s952 = scalar_lea.vmem %s1, 24
  %v953 = vld [vmem:[%s952] sm:$0xff]
  %v954 = vmul.f32 %v768, 0.8
  %v955 = vmul.f32 %v951, 0.2
  %957 = vrot.lane.b32.xlu0 %v955, 96
  %v958 = vpop.permute.xlu0 %957
  %v960 = vadd.f32 %v954, %v958
  %v961 = vadd.f32 %v960, %v953
  %s962 = scalar_lea.vmem %s9, 24
  %963 = vst.msk [vmem:[%s962] sm:$0xff] %vm199, %v961
  %s964 = scalar_lea.vmem [#allocation2], 32
  %v965 = vld [vmem:[%s964] sm:$0xff]
  %v966 = vld [vmem:[%s5] sm:$0xff]
  %v967 = vld [vmem:[%s5 + $0x8] sm:$0xff]
  %v968 = vld [vmem:[%s5 + $0x10] sm:$0xff]
  %v969 = vld [vmem:[%s5 + $0x18] sm:$0xff]
  %v971 = vsel %vm199, %v961, 0
  %973 = vmatprep.subr.mxu0 0.0
  %974 = vmatpush1.msra.mxu0 0.0
  %975 = vmatprep.subr.mxu0 0.0
  %976 = vmatpush1.msra.mxu0 0.0
  %977 = vmatprep.subr.mxu0 0.0
  %978 = vmatpush1.msra.mxu0 0.0
  %979 = vmatprep.subr.mxu0 0.0
  %980 = vmatpush1.msra.mxu0 0.0
  %981 = vmatprep.subr.mxu0 0.0
  %982 = vmatpush1.msra.mxu0 0.0
  %983 = vmatprep.subr.mxu0 0.0
  %984 = vmatpush1.msra.mxu0 0.0
  %985 = vmatprep.subr.mxu0 0.0
  %986 = vmatpush1.msra.mxu0 0.0
  %987 = vmatprep.subr.mxu0 0.0
  %988 = vmatpush1.msra.mxu0 0.0
  %989 = vmatprep.subr.mxu0 0.0
  %990 = vmatpush1.msra.mxu0 0.0
  %991 = vmatprep.subr.mxu0 0.0
  %992 = vmatpush1.msra.mxu0 0.0
  %993 = vmatprep.subr.mxu0 0.0
  %994 = vmatpush1.msra.mxu0 0.0
  %995 = vmatprep.subr.mxu0 0.0
  %996 = vmatpush1.msra.mxu0 0.0
  %997 = vmatprep.subr.mxu0 0.0
  %998 = vmatpush1.msra.mxu0 %v969
  %999 = vmatprep.subr.mxu0 0.0
  %1000 = vmatpush1.msra.mxu0 %v968
  %1001 = vmatprep.subr.mxu0 0.0
  %1002 = vmatpush1.msra.mxu0 %v967
  %1003 = vmatprep.subr.mxu0 0.0
  %1004 = vmatpush1.msra.mxu0 %v966
  %1005 = vmatprep.subr.mxu0 0.0
  %1006 = vmatpush2.msra.mxu0 0.0
  %1007 = vmatprep.subr.mxu0 0.0
  %1008 = vmatpush2.msra.mxu0 0.0
  %1009 = vmatprep.subr.mxu0 0.0
  %1010 = vmatpush2.msra.mxu0 0.0
  %1011 = vmatprep.subr.mxu0 0.0
  %1012 = vmatpush2.msra.mxu0 0.0
  %1013 = vmatprep.subr.mxu0 0.0
  %1014 = vmatpush2.msra.mxu0 0.0
  %1015 = vmatprep.subr.mxu0 0.0
  %1016 = vmatpush2.msra.mxu0 0.0
  %1017 = vmatprep.subr.mxu0 0.0
  %1018 = vmatpush2.msra.mxu0 0.0
  %1019 = vmatprep.subr.mxu0 0.0
  %1020 = vmatpush2.msra.mxu0 0.0
  %1021 = vmatprep.subr.mxu0 0.0
  %1022 = vmatpush2.msra.mxu0 0.0
  %1023 = vmatprep.subr.mxu0 0.0
  %1024 = vmatpush2.msra.mxu0 0.0
  %1025 = vmatprep.subr.mxu0 0.0
  %1026 = vmatpush2.msra.mxu0 0.0
  %1027 = vmatprep.subr.mxu0 0.0
  %1028 = vmatpush2.msra.mxu0 0.0
  %1029 = vmatprep.subr.mxu0 0.0
  %1030 = vmatpush2.msra.mxu0 0.0
  %1031 = vmatprep.subr.mxu0 0.0
  %1032 = vmatpush2.msra.mxu0 0.0
  %1033 = vmatprep.subr.mxu0 0.0
  %1034 = vmatpush2.msra.mxu0 0.0
  %1035 = vmatprep.subr.mxu0 0.0
  %1036 = vmatpush2.msra.mxu0 0.0
  %1037 = vmatprep.mubr.f32.mxu0 0.0
  %1038 = vmatmul.mubr.f32.gmra.mxu0 %v971
  %v1039 = vpop.f32.mrf.mxu0
  %v1040 = vadd.f32 0.0, %v1039
  %v1041 = vpop.f32.mrf.mxu0
  %1042 = vdwg.mxu0
  %v1043 = vadd.f32 %v965, %v1040
  %v1044 = vxor.u32 %v1043, 2147483648
  %v1045 = vmul.f32 %v1044, 1.442695
  %v1046 = vpow.pop %v1045
  %v1047 = vadd.f32 %v1046, 1.0
  %v1048 = vrcp.pop %v1047
  %v1049 = vmul.f32 1.0, %v1048
  %v1050 = vmul.f32 %v1049, %v961
  %v1051 = vld [vmem:[%s6] sm:$0xff]
  %v1052 = vld [vmem:[%s6 + $0x8] sm:$0xff]
  %v1053 = vld [vmem:[%s6 + $0x10] sm:$0xff]
  %v1054 = vld [vmem:[%s6 + $0x18] sm:$0xff]
  %v1056 = vsel %vm199, %v1050, 0
  %1058 = vmatprep.subr.mxu0 0.0
  %1059 = vmatpush1.msra.mxu0 0.0
  %1060 = vmatprep.subr.mxu0 0.0
  %1061 = vmatpush1.msra.mxu0 0.0
  %1062 = vmatprep.subr.mxu0 0.0
  %1063 = vmatpush1.msra.mxu0 0.0
  %1064 = vmatprep.subr.mxu0 0.0
  %1065 = vmatpush1.msra.mxu0 0.0
  %1066 = vmatprep.subr.mxu0 0.0
  %1067 = vmatpush1.msra.mxu0 0.0
  %1068 = vmatprep.subr.mxu0 0.0
  %1069 = vmatpush1.msra.mxu0 0.0
  %1070 = vmatprep.subr.mxu0 0.0
  %1071 = vmatpush1.msra.mxu0 0.0
  %1072 = vmatprep.subr.mxu0 0.0
  %1073 = vmatpush1.msra.mxu0 0.0
  %1074 = vmatprep.subr.mxu0 0.0
  %1075 = vmatpush1.msra.mxu0 0.0
  %1076 = vmatprep.subr.mxu0 0.0
  %1077 = vmatpush1.msra.mxu0 0.0
  %1078 = vmatprep.subr.mxu0 0.0
  %1079 = vmatpush1.msra.mxu0 0.0
  %1080 = vmatprep.subr.mxu0 0.0
  %1081 = vmatpush1.msra.mxu0 0.0
  %1082 = vmatprep.subr.mxu0 0.0
  %1083 = vmatpush1.msra.mxu0 %v1054
  %1084 = vmatprep.subr.mxu0 0.0
  %1085 = vmatpush1.msra.mxu0 %v1053
  %1086 = vmatprep.subr.mxu0 0.0
  %1087 = vmatpush1.msra.mxu0 %v1052
  %1088 = vmatprep.subr.mxu0 0.0
  %1089 = vmatpush1.msra.mxu0 %v1051
  %1090 = vmatprep.subr.mxu0 0.0
  %1091 = vmatpush2.msra.mxu0 0.0
  %1092 = vmatprep.subr.mxu0 0.0
  %1093 = vmatpush2.msra.mxu0 0.0
  %1094 = vmatprep.subr.mxu0 0.0
  %1095 = vmatpush2.msra.mxu0 0.0
  %1096 = vmatprep.subr.mxu0 0.0
  %1097 = vmatpush2.msra.mxu0 0.0
  %1098 = vmatprep.subr.mxu0 0.0
  %1099 = vmatpush2.msra.mxu0 0.0
  %1100 = vmatprep.subr.mxu0 0.0
  %1101 = vmatpush2.msra.mxu0 0.0
  %1102 = vmatprep.subr.mxu0 0.0
  %1103 = vmatpush2.msra.mxu0 0.0
  %1104 = vmatprep.subr.mxu0 0.0
  %1105 = vmatpush2.msra.mxu0 0.0
  %1106 = vmatprep.subr.mxu0 0.0
  %1107 = vmatpush2.msra.mxu0 0.0
  %1108 = vmatprep.subr.mxu0 0.0
  %1109 = vmatpush2.msra.mxu0 0.0
  %1110 = vmatprep.subr.mxu0 0.0
  %1111 = vmatpush2.msra.mxu0 0.0
  %1112 = vmatprep.subr.mxu0 0.0
  %1113 = vmatpush2.msra.mxu0 0.0
  %1114 = vmatprep.subr.mxu0 0.0
  %1115 = vmatpush2.msra.mxu0 0.0
  %1116 = vmatprep.subr.mxu0 0.0
  %1117 = vmatpush2.msra.mxu0 0.0
  %1118 = vmatprep.subr.mxu0 0.0
  %1119 = vmatpush2.msra.mxu0 0.0
  %1120 = vmatprep.subr.mxu0 0.0
  %1121 = vmatpush2.msra.mxu0 0.0
  %1122 = vmatprep.mubr.f32.mxu0 0.0
  %1123 = vmatmul.mubr.f32.gmra.mxu0 %v1056
  %v1124 = vpop.f32.mrf.mxu0
  %v1125 = vadd.f32 0.0, %v1124
  %v1126 = vpop.f32.mrf.mxu0
  %1127 = vdwg.mxu0
  %1129 = vrot.lane.b32.xlu0 %v1125, 64
  %v1130 = vpop.permute.xlu0 %1129
  %v1132 = vadd.f32 %v965, %v1130
  %v1133 = vtanh.pop %v1132
  %v1134 = vsub.f32 1.0, %v1049
  %1136 = vrot.lane.b32.xlu0 %v1133, 96
  %v1137 = vpop.permute.xlu0 %1136
  %v1139 = vmul.f32 %v1134, %v1137
  %1140 = vrot.lane.b32.xlu0 %v961, 32
  %v1141 = vpop.permute.xlu0 %1140
  %v1143 = vmul.f32 %v1049, %v1141
  %v1144 = vadd.f32 %v1139, %v1143
  %s1145 = scalar_lea.vmem %s1, 32
  %v1146 = vld [vmem:[%s1145] sm:$0xff]
  %v1147 = vmul.f32 %v961, 0.8
  %v1148 = vmul.f32 %v1144, 0.2
  %1150 = vrot.lane.b32.xlu0 %v1148, 96
  %v1151 = vpop.permute.xlu0 %1150
  %v1153 = vadd.f32 %v1147, %v1151
  %v1154 = vadd.f32 %v1153, %v1146
  %s1155 = scalar_lea.vmem %s9, 32
  %1156 = vst.msk [vmem:[%s1155] sm:$0xff] %vm199, %v1154
  %s1157 = scalar_lea.vmem [#allocation2], 40
  %v1158 = vld [vmem:[%s1157] sm:$0xff]
  %v1159 = vld [vmem:[%s5] sm:$0xff]
  %v1160 = vld [vmem:[%s5 + $0x8] sm:$0xff]
  %v1161 = vld [vmem:[%s5 + $0x10] sm:$0xff]
  %v1162 = vld [vmem:[%s5 + $0x18] sm:$0xff]
  %v1164 = vsel %vm199, %v1154, 0
  %1166 = vmatprep.subr.mxu0 0.0
  %1167 = vmatpush1.msra.mxu0 0.0
  %1168 = vmatprep.subr.mxu0 0.0
  %1169 = vmatpush1.msra.mxu0 0.0
  %1170 = vmatprep.subr.mxu0 0.0
  %1171 = vmatpush1.msra.mxu0 0.0
  %1172 = vmatprep.subr.mxu0 0.0
  %1173 = vmatpush1.msra.mxu0 0.0
  %1174 = vmatprep.subr.mxu0 0.0
  %1175 = vmatpush1.msra.mxu0 0.0
  %1176 = vmatprep.subr.mxu0 0.0
  %1177 = vmatpush1.msra.mxu0 0.0
  %1178 = vmatprep.subr.mxu0 0.0
  %1179 = vmatpush1.msra.mxu0 0.0
  %1180 = vmatprep.subr.mxu0 0.0
  %1181 = vmatpush1.msra.mxu0 0.0
  %1182 = vmatprep.subr.mxu0 0.0
  %1183 = vmatpush1.msra.mxu0 0.0
  %1184 = vmatprep.subr.mxu0 0.0
  %1185 = vmatpush1.msra.mxu0 0.0
  %1186 = vmatprep.subr.mxu0 0.0
  %1187 = vmatpush1.msra.mxu0 0.0
  %1188 = vmatprep.subr.mxu0 0.0
  %1189 = vmatpush1.msra.mxu0 0.0
  %1190 = vmatprep.subr.mxu0 0.0
  %1191 = vmatpush1.msra.mxu0 %v1162
  %1192 = vmatprep.subr.mxu0 0.0
  %1193 = vmatpush1.msra.mxu0 %v1161
  %1194 = vmatprep.subr.mxu0 0.0
  %1195 = vmatpush1.msra.mxu0 %v1160
  %1196 = vmatprep.subr.mxu0 0.0
  %1197 = vmatpush1.msra.mxu0 %v1159
  %1198 = vmatprep.subr.mxu0 0.0
  %1199 = vmatpush2.msra.mxu0 0.0
  %1200 = vmatprep.subr.mxu0 0.0
  %1201 = vmatpush2.msra.mxu0 0.0
  %1202 = vmatprep.subr.mxu0 0.0
  %1203 = vmatpush2.msra.mxu0 0.0
  %1204 = vmatprep.subr.mxu0 0.0
  %1205 = vmatpush2.msra.mxu0 0.0
  %1206 = vmatprep.subr.mxu0 0.0
  %1207 = vmatpush2.msra.mxu0 0.0
  %1208 = vmatprep.subr.mxu0 0.0
  %1209 = vmatpush2.msra.mxu0 0.0
  %1210 = vmatprep.subr.mxu0 0.0
  %1211 = vmatpush2.msra.mxu0 0.0
  %1212 = vmatprep.subr.mxu0 0.0
  %1213 = vmatpush2.msra.mxu0 0.0
  %1214 = vmatprep.subr.mxu0 0.0
  %1215 = vmatpush2.msra.mxu0 0.0
  %1216 = vmatprep.subr.mxu0 0.0
  %1217 = vmatpush2.msra.mxu0 0.0
  %1218 = vmatprep.subr.mxu0 0.0
  %1219 = vmatpush2.msra.mxu0 0.0
  %1220 = vmatprep.subr.mxu0 0.0
  %1221 = vmatpush2.msra.mxu0 0.0
  %1222 = vmatprep.subr.mxu0 0.0
  %1223 = vmatpush2.msra.mxu0 0.0
  %1224 = vmatprep.subr.mxu0 0.0
  %1225 = vmatpush2.msra.mxu0 0.0
  %1226 = vmatprep.subr.mxu0 0.0
  %1227 = vmatpush2.msra.mxu0 0.0
  %1228 = vmatprep.subr.mxu0 0.0
  %1229 = vmatpush2.msra.mxu0 0.0
  %1230 = vmatprep.mubr.f32.mxu0 0.0
  %1231 = vmatmul.mubr.f32.gmra.mxu0 %v1164
  %v1232 = vpop.f32.mrf.mxu0
  %v1233 = vadd.f32 0.0, %v1232
  %v1234 = vpop.f32.mrf.mxu0
  %1235 = vdwg.mxu0
  %v1236 = vadd.f32 %v1158, %v1233
  %v1237 = vxor.u32 %v1236, 2147483648
  %v1238 = vmul.f32 %v1237, 1.442695
  %v1239 = vpow.pop %v1238
  %v1240 = vadd.f32 %v1239, 1.0
  %v1241 = vrcp.pop %v1240
  %v1242 = vmul.f32 1.0, %v1241
  %v1243 = vmul.f32 %v1242, %v1154
  %v1244 = vld [vmem:[%s6] sm:$0xff]
  %v1245 = vld [vmem:[%s6 + $0x8] sm:$0xff]
  %v1246 = vld [vmem:[%s6 + $0x10] sm:$0xff]
  %v1247 = vld [vmem:[%s6 + $0x18] sm:$0xff]
  %v1249 = vsel %vm199, %v1243, 0
  %1251 = vmatprep.subr.mxu0 0.0
  %1252 = vmatpush1.msra.mxu0 0.0
  %1253 = vmatprep.subr.mxu0 0.0
  %1254 = vmatpush1.msra.mxu0 0.0
  %1255 = vmatprep.subr.mxu0 0.0
  %1256 = vmatpush1.msra.mxu0 0.0
  %1257 = vmatprep.subr.mxu0 0.0
  %1258 = vmatpush1.msra.mxu0 0.0
  %1259 = vmatprep.subr.mxu0 0.0
  %1260 = vmatpush1.msra.mxu0 0.0
  %1261 = vmatprep.subr.mxu0 0.0
  %1262 = vmatpush1.msra.mxu0 0.0
  %1263 = vmatprep.subr.mxu0 0.0
  %1264 = vmatpush1.msra.mxu0 0.0
  %1265 = vmatprep.subr.mxu0 0.0
  %1266 = vmatpush1.msra.mxu0 0.0
  %1267 = vmatprep.subr.mxu0 0.0
  %1268 = vmatpush1.msra.mxu0 0.0
  %1269 = vmatprep.subr.mxu0 0.0
  %1270 = vmatpush1.msra.mxu0 0.0
  %1271 = vmatprep.subr.mxu0 0.0
  %1272 = vmatpush1.msra.mxu0 0.0
  %1273 = vmatprep.subr.mxu0 0.0
  %1274 = vmatpush1.msra.mxu0 0.0
  %1275 = vmatprep.subr.mxu0 0.0
  %1276 = vmatpush1.msra.mxu0 %v1247
  %1277 = vmatprep.subr.mxu0 0.0
  %1278 = vmatpush1.msra.mxu0 %v1246
  %1279 = vmatprep.subr.mxu0 0.0
  %1280 = vmatpush1.msra.mxu0 %v1245
  %1281 = vmatprep.subr.mxu0 0.0
  %1282 = vmatpush1.msra.mxu0 %v1244
  %1283 = vmatprep.subr.mxu0 0.0
  %1284 = vmatpush2.msra.mxu0 0.0
  %1285 = vmatprep.subr.mxu0 0.0
  %1286 = vmatpush2.msra.mxu0 0.0
  %1287 = vmatprep.subr.mxu0 0.0
  %1288 = vmatpush2.msra.mxu0 0.0
  %1289 = vmatprep.subr.mxu0 0.0
  %1290 = vmatpush2.msra.mxu0 0.0
  %1291 = vmatprep.subr.mxu0 0.0
  %1292 = vmatpush2.msra.mxu0 0.0
  %1293 = vmatprep.subr.mxu0 0.0
  %1294 = vmatpush2.msra.mxu0 0.0
  %1295 = vmatprep.subr.mxu0 0.0
  %1296 = vmatpush2.msra.mxu0 0.0
  %1297 = vmatprep.subr.mxu0 0.0
  %1298 = vmatpush2.msra.mxu0 0.0
  %1299 = vmatprep.subr.mxu0 0.0
  %1300 = vmatpush2.msra.mxu0 0.0
  %1301 = vmatprep.subr.mxu0 0.0
  %1302 = vmatpush2.msra.mxu0 0.0
  %1303 = vmatprep.subr.mxu0 0.0
  %1304 = vmatpush2.msra.mxu0 0.0
  %1305 = vmatprep.subr.mxu0 0.0
  %1306 = vmatpush2.msra.mxu0 0.0
  %1307 = vmatprep.subr.mxu0 0.0
  %1308 = vmatpush2.msra.mxu0 0.0
  %1309 = vmatprep.subr.mxu0 0.0
  %1310 = vmatpush2.msra.mxu0 0.0
  %1311 = vmatprep.subr.mxu0 0.0
  %1312 = vmatpush2.msra.mxu0 0.0
  %1313 = vmatprep.subr.mxu0 0.0
  %1314 = vmatpush2.msra.mxu0 0.0
  %1315 = vmatprep.mubr.f32.mxu0 0.0
  %1316 = vmatmul.mubr.f32.gmra.mxu0 %v1249
  %v1317 = vpop.f32.mrf.mxu0
  %v1318 = vadd.f32 0.0, %v1317
  %v1319 = vpop.f32.mrf.mxu0
  %1320 = vdwg.mxu0
  %1322 = vrot.lane.b32.xlu0 %v1318, 64
  %v1323 = vpop.permute.xlu0 %1322
  %v1325 = vadd.f32 %v1158, %v1323
  %v1326 = vtanh.pop %v1325
  %v1327 = vsub.f32 1.0, %v1242
  %1329 = vrot.lane.b32.xlu0 %v1326, 96
  %v1330 = vpop.permute.xlu0 %1329
  %v1332 = vmul.f32 %v1327, %v1330
  %1333 = vrot.lane.b32.xlu0 %v1154, 32
  %v1334 = vpop.permute.xlu0 %1333
  %v1336 = vmul.f32 %v1242, %v1334
  %v1337 = vadd.f32 %v1332, %v1336
  %s1338 = scalar_lea.vmem %s1, 40
  %v1339 = vld [vmem:[%s1338] sm:$0xff]
  %v1340 = vmul.f32 %v1154, 0.8
  %v1341 = vmul.f32 %v1337, 0.2
  %1343 = vrot.lane.b32.xlu0 %v1341, 96
  %v1344 = vpop.permute.xlu0 %1343
  %v1346 = vadd.f32 %v1340, %v1344
  %v1347 = vadd.f32 %v1346, %v1339
  %s1348 = scalar_lea.vmem %s9, 40
  %1349 = vst.msk [vmem:[%s1348] sm:$0xff] %vm199, %v1347
  %s1350 = scalar_lea.vmem [#allocation2], 48
  %v1351 = vld [vmem:[%s1350] sm:$0xff]
  %v1352 = vld [vmem:[%s5] sm:$0xff]
  %v1353 = vld [vmem:[%s5 + $0x8] sm:$0xff]
  %v1354 = vld [vmem:[%s5 + $0x10] sm:$0xff]
  %v1355 = vld [vmem:[%s5 + $0x18] sm:$0xff]
  %v1357 = vsel %vm199, %v1347, 0
  %1359 = vmatprep.subr.mxu0 0.0
  %1360 = vmatpush1.msra.mxu0 0.0
  %1361 = vmatprep.subr.mxu0 0.0
  %1362 = vmatpush1.msra.mxu0 0.0
  %1363 = vmatprep.subr.mxu0 0.0
  %1364 = vmatpush1.msra.mxu0 0.0
  %1365 = vmatprep.subr.mxu0 0.0
  %1366 = vmatpush1.msra.mxu0 0.0
  %1367 = vmatprep.subr.mxu0 0.0
  %1368 = vmatpush1.msra.mxu0 0.0
  %1369 = vmatprep.subr.mxu0 0.0
  %1370 = vmatpush1.msra.mxu0 0.0
  %1371 = vmatprep.subr.mxu0 0.0
  %1372 = vmatpush1.msra.mxu0 0.0
  %1373 = vmatprep.subr.mxu0 0.0
  %1374 = vmatpush1.msra.mxu0 0.0
  %1375 = vmatprep.subr.mxu0 0.0
  %1376 = vmatpush1.msra.mxu0 0.0
  %1377 = vmatprep.subr.mxu0 0.0
  %1378 = vmatpush1.msra.mxu0 0.0
  %1379 = vmatprep.subr.mxu0 0.0
  %1380 = vmatpush1.msra.mxu0 0.0
  %1381 = vmatprep.subr.mxu0 0.0
  %1382 = vmatpush1.msra.mxu0 0.0
  %1383 = vmatprep.subr.mxu0 0.0
  %1384 = vmatpush1.msra.mxu0 %v1355
  %1385 = vmatprep.subr.mxu0 0.0
  %1386 = vmatpush1.msra.mxu0 %v1354
  %1387 = vmatprep.subr.mxu0 0.0
  %1388 = vmatpush1.msra.mxu0 %v1353
  %1389 = vmatprep.subr.mxu0 0.0
  %1390 = vmatpush1.msra.mxu0 %v1352
  %1391 = vmatprep.subr.mxu0 0.0
  %1392 = vmatpush2.msra.mxu0 0.0
  %1393 = vmatprep.subr.mxu0 0.0
  %1394 = vmatpush2.msra.mxu0 0.0
  %1395 = vmatprep.subr.mxu0 0.0
  %1396 = vmatpush2.msra.mxu0 0.0
  %1397 = vmatprep.subr.mxu0 0.0
  %1398 = vmatpush2.msra.mxu0 0.0
  %1399 = vmatprep.subr.mxu0 0.0
  %1400 = vmatpush2.msra.mxu0 0.0
  %1401 = vmatprep.subr.mxu0 0.0
  %1402 = vmatpush2.msra.mxu0 0.0
  %1403 = vmatprep.subr.mxu0 0.0
  %1404 = vmatpush2.msra.mxu0 0.0
  %1405 = vmatprep.subr.mxu0 0.0
  %1406 = vmatpush2.msra.mxu0 0.0
  %1407 = vmatprep.subr.mxu0 0.0
  %1408 = vmatpush2.msra.mxu0 0.0
  %1409 = vmatprep.subr.mxu0 0.0
  %1410 = vmatpush2.msra.mxu0 0.0
  %1411 = vmatprep.subr.mxu0 0.0
  %1412 = vmatpush2.msra.mxu0 0.0
  %1413 = vmatprep.subr.mxu0 0.0
  %1414 = vmatpush2.msra.mxu0 0.0
  %1415 = vmatprep.subr.mxu0 0.0
  %1416 = vmatpush2.msra.mxu0 0.0
  %1417 = vmatprep.subr.mxu0 0.0
  %1418 = vmatpush2.msra.mxu0 0.0
  %1419 = vmatprep.subr.mxu0 0.0
  %1420 = vmatpush2.msra.mxu0 0.0
  %1421 = vmatprep.subr.mxu0 0.0
  %1422 = vmatpush2.msra.mxu0 0.0
  %1423 = vmatprep.mubr.f32.mxu0 0.0
  %1424 = vmatmul.mubr.f32.gmra.mxu0 %v1357
  %v1425 = vpop.f32.mrf.mxu0
  %v1426 = vadd.f32 0.0, %v1425
  %v1427 = vpop.f32.mrf.mxu0
  %1428 = vdwg.mxu0
  %v1429 = vadd.f32 %v1351, %v1426
  %v1430 = vxor.u32 %v1429, 2147483648
  %v1431 = vmul.f32 %v1430, 1.442695
  %v1432 = vpow.pop %v1431
  %v1433 = vadd.f32 %v1432, 1.0
  %v1434 = vrcp.pop %v1433
  %v1435 = vmul.f32 1.0, %v1434
  %v1436 = vmul.f32 %v1435, %v1347
  %v1437 = vld [vmem:[%s6] sm:$0xff]
  %v1438 = vld [vmem:[%s6 + $0x8] sm:$0xff]
  %v1439 = vld [vmem:[%s6 + $0x10] sm:$0xff]
  %v1440 = vld [vmem:[%s6 + $0x18] sm:$0xff]
  %v1442 = vsel %vm199, %v1436, 0
  %1444 = vmatprep.subr.mxu0 0.0
  %1445 = vmatpush1.msra.mxu0 0.0
  %1446 = vmatprep.subr.mxu0 0.0
  %1447 = vmatpush1.msra.mxu0 0.0
  %1448 = vmatprep.subr.mxu0 0.0
  %1449 = vmatpush1.msra.mxu0 0.0
  %1450 = vmatprep.subr.mxu0 0.0
  %1451 = vmatpush1.msra.mxu0 0.0
  %1452 = vmatprep.subr.mxu0 0.0
  %1453 = vmatpush1.msra.mxu0 0.0
  %1454 = vmatprep.subr.mxu0 0.0
  %1455 = vmatpush1.msra.mxu0 0.0
  %1456 = vmatprep.subr.mxu0 0.0
  %1457 = vmatpush1.msra.mxu0 0.0
  %1458 = vmatprep.subr.mxu0 0.0
  %1459 = vmatpush1.msra.mxu0 0.0
  %1460 = vmatprep.subr.mxu0 0.0
  %1461 = vmatpush1.msra.mxu0 0.0
  %1462 = vmatprep.subr.mxu0 0.0
  %1463 = vmatpush1.msra.mxu0 0.0
  %1464 = vmatprep.subr.mxu0 0.0
  %1465 = vmatpush1.msra.mxu0 0.0
  %1466 = vmatprep.subr.mxu0 0.0
  %1467 = vmatpush1.msra.mxu0 0.0
  %1468 = vmatprep.subr.mxu0 0.0
  %1469 = vmatpush1.msra.mxu0 %v1440
  %1470 = vmatprep.subr.mxu0 0.0
  %1471 = vmatpush1.msra.mxu0 %v1439
  %1472 = vmatprep.subr.mxu0 0.0
  %1473 = vmatpush1.msra.mxu0 %v1438
  %1474 = vmatprep.subr.mxu0 0.0
  %1475 = vmatpush1.msra.mxu0 %v1437
  %1476 = vmatprep.subr.mxu0 0.0
  %1477 = vmatpush2.msra.mxu0 0.0
  %1478 = vmatprep.subr.mxu0 0.0
  %1479 = vmatpush2.msra.mxu0 0.0
  %1480 = vmatprep.subr.mxu0 0.0
  %1481 = vmatpush2.msra.mxu0 0.0
  %1482 = vmatprep.subr.mxu0 0.0
  %1483 = vmatpush2.msra.mxu0 0.0
  %1484 = vmatprep.subr.mxu0 0.0
  %1485 = vmatpush2.msra.mxu0 0.0
  %1486 = vmatprep.subr.mxu0 0.0
  %1487 = vmatpush2.msra.mxu0 0.0
  %1488 = vmatprep.subr.mxu0 0.0
  %1489 = vmatpush2.msra.mxu0 0.0
  %1490 = vmatprep.subr.mxu0 0.0
  %1491 = vmatpush2.msra.mxu0 0.0
  %1492 = vmatprep.subr.mxu0 0.0
  %1493 = vmatpush2.msra.mxu0 0.0
  %1494 = vmatprep.subr.mxu0 0.0
  %1495 = vmatpush2.msra.mxu0 0.0
  %1496 = vmatprep.subr.mxu0 0.0
  %1497 = vmatpush2.msra.mxu0 0.0
  %1498 = vmatprep.subr.mxu0 0.0
  %1499 = vmatpush2.msra.mxu0 0.0
  %1500 = vmatprep.subr.mxu0 0.0
  %1501 = vmatpush2.msra.mxu0 0.0
  %1502 = vmatprep.subr.mxu0 0.0
  %1503 = vmatpush2.msra.mxu0 0.0
  %1504 = vmatprep.subr.mxu0 0.0
  %1505 = vmatpush2.msra.mxu0 0.0
  %1506 = vmatprep.subr.mxu0 0.0
  %1507 = vmatpush2.msra.mxu0 0.0
  %1508 = vmatprep.mubr.f32.mxu0 0.0
  %1509 = vmatmul.mubr.f32.gmra.mxu0 %v1442
  %v1510 = vpop.f32.mrf.mxu0
  %v1511 = vadd.f32 0.0, %v1510
  %v1512 = vpop.f32.mrf.mxu0
  %1513 = vdwg.mxu0
  %1515 = vrot.lane.b32.xlu0 %v1511, 64
  %v1516 = vpop.permute.xlu0 %1515
  %v1518 = vadd.f32 %v1351, %v1516
  %v1519 = vtanh.pop %v1518
  %v1520 = vsub.f32 1.0, %v1435
  %1522 = vrot.lane.b32.xlu0 %v1519, 96
  %v1523 = vpop.permute.xlu0 %1522
  %v1525 = vmul.f32 %v1520, %v1523
  %1526 = vrot.lane.b32.xlu0 %v1347, 32
  %v1527 = vpop.permute.xlu0 %1526
  %v1529 = vmul.f32 %v1435, %v1527
  %v1530 = vadd.f32 %v1525, %v1529
  %s1531 = scalar_lea.vmem %s1, 48
  %v1532 = vld [vmem:[%s1531] sm:$0xff]
  %v1533 = vmul.f32 %v1347, 0.8
  %v1534 = vmul.f32 %v1530, 0.2
  %1536 = vrot.lane.b32.xlu0 %v1534, 96
  %v1537 = vpop.permute.xlu0 %1536
  %v1539 = vadd.f32 %v1533, %v1537
  %v1540 = vadd.f32 %v1539, %v1532
  %s1541 = scalar_lea.vmem %s9, 48
  %1542 = vst.msk [vmem:[%s1541] sm:$0xff] %vm199, %v1540
  %s1543 = scalar_lea.vmem [#allocation2], 56
  %v1544 = vld [vmem:[%s1543] sm:$0xff]
  %v1545 = vld [vmem:[%s5] sm:$0xff]
  %v1546 = vld [vmem:[%s5 + $0x8] sm:$0xff]
  %v1547 = vld [vmem:[%s5 + $0x10] sm:$0xff]
  %v1548 = vld [vmem:[%s5 + $0x18] sm:$0xff]
  %v1550 = vsel %vm199, %v1540, 0
  %1552 = vmatprep.subr.mxu0 0.0
  %1553 = vmatpush1.msra.mxu0 0.0
  %1554 = vmatprep.subr.mxu0 0.0
  %1555 = vmatpush1.msra.mxu0 0.0
  %1556 = vmatprep.subr.mxu0 0.0
  %1557 = vmatpush1.msra.mxu0 0.0
  %1558 = vmatprep.subr.mxu0 0.0
  %1559 = vmatpush1.msra.mxu0 0.0
  %1560 = vmatprep.subr.mxu0 0.0
  %1561 = vmatpush1.msra.mxu0 0.0
  %1562 = vmatprep.subr.mxu0 0.0
  %1563 = vmatpush1.msra.mxu0 0.0
  %1564 = vmatprep.subr.mxu0 0.0
  %1565 = vmatpush1.msra.mxu0 0.0
  %1566 = vmatprep.subr.mxu0 0.0
  %1567 = vmatpush1.msra.mxu0 0.0
  %1568 = vmatprep.subr.mxu0 0.0
  %1569 = vmatpush1.msra.mxu0 0.0
  %1570 = vmatprep.subr.mxu0 0.0
  %1571 = vmatpush1.msra.mxu0 0.0
  %1572 = vmatprep.subr.mxu0 0.0
  %1573 = vmatpush1.msra.mxu0 0.0
  %1574 = vmatprep.subr.mxu0 0.0
  %1575 = vmatpush1.msra.mxu0 0.0
  %1576 = vmatprep.subr.mxu0 0.0
  %1577 = vmatpush1.msra.mxu0 %v1548
  %1578 = vmatprep.subr.mxu0 0.0
  %1579 = vmatpush1.msra.mxu0 %v1547
  %1580 = vmatprep.subr.mxu0 0.0
  %1581 = vmatpush1.msra.mxu0 %v1546
  %1582 = vmatprep.subr.mxu0 0.0
  %1583 = vmatpush1.msra.mxu0 %v1545
  %1584 = vmatprep.subr.mxu0 0.0
  %1585 = vmatpush2.msra.mxu0 0.0
  %1586 = vmatprep.subr.mxu0 0.0
  %1587 = vmatpush2.msra.mxu0 0.0
  %1588 = vmatprep.subr.mxu0 0.0
  %1589 = vmatpush2.msra.mxu0 0.0
  %1590 = vmatprep.subr.mxu0 0.0
  %1591 = vmatpush2.msra.mxu0 0.0
  %1592 = vmatprep.subr.mxu0 0.0
  %1593 = vmatpush2.msra.mxu0 0.0
  %1594 = vmatprep.subr.mxu0 0.0
  %1595 = vmatpush2.msra.mxu0 0.0
  %1596 = vmatprep.subr.mxu0 0.0
  %1597 = vmatpush2.msra.mxu0 0.0
  %1598 = vmatprep.subr.mxu0 0.0
  %1599 = vmatpush2.msra.mxu0 0.0
  %1600 = vmatprep.subr.mxu0 0.0
  %1601 = vmatpush2.msra.mxu0 0.0
  %1602 = vmatprep.subr.mxu0 0.0
  %1603 = vmatpush2.msra.mxu0 0.0
  %1604 = vmatprep.subr.mxu0 0.0
  %1605 = vmatpush2.msra.mxu0 0.0
  %1606 = vmatprep.subr.mxu0 0.0
  %1607 = vmatpush2.msra.mxu0 0.0
  %1608 = vmatprep.subr.mxu0 0.0
  %1609 = vmatpush2.msra.mxu0 0.0
  %1610 = vmatprep.subr.mxu0 0.0
  %1611 = vmatpush2.msra.mxu0 0.0
  %1612 = vmatprep.subr.mxu0 0.0
  %1613 = vmatpush2.msra.mxu0 0.0
  %1614 = vmatprep.subr.mxu0 0.0
  %1615 = vmatpush2.msra.mxu0 0.0
  %1616 = vmatprep.mubr.f32.mxu0 0.0
  %1617 = vmatmul.mubr.f32.gmra.mxu0 %v1550
  %v1618 = vpop.f32.mrf.mxu0
  %v1619 = vadd.f32 0.0, %v1618
  %v1620 = vpop.f32.mrf.mxu0
  %1621 = vdwg.mxu0
  %v1622 = vadd.f32 %v1544, %v1619
  %v1623 = vxor.u32 %v1622, 2147483648
  %v1624 = vmul.f32 %v1623, 1.442695
  %v1625 = vpow.pop %v1624
  %v1626 = vadd.f32 %v1625, 1.0
  %v1627 = vrcp.pop %v1626
  %v1628 = vmul.f32 1.0, %v1627
  %v1629 = vmul.f32 %v1628, %v1540
  %v1630 = vld [vmem:[%s6] sm:$0xff]
  %v1631 = vld [vmem:[%s6 + $0x8] sm:$0xff]
  %v1632 = vld [vmem:[%s6 + $0x10] sm:$0xff]
  %v1633 = vld [vmem:[%s6 + $0x18] sm:$0xff]
  %v1635 = vsel %vm199, %v1629, 0
  %1637 = vmatprep.subr.mxu0 0.0
  %1638 = vmatpush1.msra.mxu0 0.0
  %1639 = vmatprep.subr.mxu0 0.0
  %1640 = vmatpush1.msra.mxu0 0.0
  %1641 = vmatprep.subr.mxu0 0.0
  %1642 = vmatpush1.msra.mxu0 0.0
  %1643 = vmatprep.subr.mxu0 0.0
  %1644 = vmatpush1.msra.mxu0 0.0
  %1645 = vmatprep.subr.mxu0 0.0
  %1646 = vmatpush1.msra.mxu0 0.0
  %1647 = vmatprep.subr.mxu0 0.0
  %1648 = vmatpush1.msra.mxu0 0.0
  %1649 = vmatprep.subr.mxu0 0.0
  %1650 = vmatpush1.msra.mxu0 0.0
  %1651 = vmatprep.subr.mxu0 0.0
  %1652 = vmatpush1.msra.mxu0 0.0
  %1653 = vmatprep.subr.mxu0 0.0
  %1654 = vmatpush1.msra.mxu0 0.0
  %1655 = vmatprep.subr.mxu0 0.0
  %1656 = vmatpush1.msra.mxu0 0.0
  %1657 = vmatprep.subr.mxu0 0.0
  %1658 = vmatpush1.msra.mxu0 0.0
  %1659 = vmatprep.subr.mxu0 0.0
  %1660 = vmatpush1.msra.mxu0 0.0
  %1661 = vmatprep.subr.mxu0 0.0
  %1662 = vmatpush1.msra.mxu0 %v1633
  %1663 = vmatprep.subr.mxu0 0.0
  %1664 = vmatpush1.msra.mxu0 %v1632
  %1665 = vmatprep.subr.mxu0 0.0
  %1666 = vmatpush1.msra.mxu0 %v1631
  %1667 = vmatprep.subr.mxu0 0.0
  %1668 = vmatpush1.msra.mxu0 %v1630
  %1669 = vmatprep.subr.mxu0 0.0
  %1670 = vmatpush2.msra.mxu0 0.0
  %1671 = vmatprep.subr.mxu0 0.0
  %1672 = vmatpush2.msra.mxu0 0.0
  %1673 = vmatprep.subr.mxu0 0.0
  %1674 = vmatpush2.msra.mxu0 0.0
  %1675 = vmatprep.subr.mxu0 0.0
  %1676 = vmatpush2.msra.mxu0 0.0
  %1677 = vmatprep.subr.mxu0 0.0
  %1678 = vmatpush2.msra.mxu0 0.0
  %1679 = vmatprep.subr.mxu0 0.0
  %1680 = vmatpush2.msra.mxu0 0.0
  %1681 = vmatprep.subr.mxu0 0.0
  %1682 = vmatpush2.msra.mxu0 0.0
  %1683 = vmatprep.subr.mxu0 0.0
  %1684 = vmatpush2.msra.mxu0 0.0
  %1685 = vmatprep.subr.mxu0 0.0
  %1686 = vmatpush2.msra.mxu0 0.0
  %1687 = vmatprep.subr.mxu0 0.0
  %1688 = vmatpush2.msra.mxu0 0.0
  %1689 = vmatprep.subr.mxu0 0.0
  %1690 = vmatpush2.msra.mxu0 0.0
  %1691 = vmatprep.subr.mxu0 0.0
  %1692 = vmatpush2.msra.mxu0 0.0
  %1693 = vmatprep.subr.mxu0 0.0
  %1694 = vmatpush2.msra.mxu0 0.0
  %1695 = vmatprep.subr.mxu0 0.0
  %1696 = vmatpush2.msra.mxu0 0.0
  %1697 = vmatprep.subr.mxu0 0.0
  %1698 = vmatpush2.msra.mxu0 0.0
  %1699 = vmatprep.subr.mxu0 0.0
  %1700 = vmatpush2.msra.mxu0 0.0
  %1701 = vmatprep.mubr.f32.mxu0 0.0
  %1702 = vmatmul.mubr.f32.gmra.mxu0 %v1635
  %v1703 = vpop.f32.mrf.mxu0
  %v1704 = vadd.f32 0.0, %v1703
  %v1705 = vpop.f32.mrf.mxu0
  %1706 = vdwg.mxu0
  %1708 = vrot.lane.b32.xlu0 %v1704, 64
  %v1709 = vpop.permute.xlu0 %1708
  %v1711 = vadd.f32 %v1544, %v1709
  %v1712 = vtanh.pop %v1711
  %v1713 = vsub.f32 1.0, %v1628
  %1715 = vrot.lane.b32.xlu0 %v1712, 96
  %v1716 = vpop.permute.xlu0 %1715
  %v1718 = vmul.f32 %v1713, %v1716
  %1719 = vrot.lane.b32.xlu0 %v1540, 32
  %v1720 = vpop.permute.xlu0 %1719
  %v1722 = vmul.f32 %v1628, %v1720
  %v1723 = vadd.f32 %v1718, %v1722
  %s1724 = scalar_lea.vmem %s1, 56
  %v1725 = vld [vmem:[%s1724] sm:$0xff]
  %v1726 = vmul.f32 %v1540, 0.8
  %v1727 = vmul.f32 %v1723, 0.2
  %1729 = vrot.lane.b32.xlu0 %v1727, 96
  %v1730 = vpop.permute.xlu0 %1729
  %v1732 = vadd.f32 %v1726, %v1730
  %v1733 = vadd.f32 %v1732, %v1725
  %s1734 = scalar_lea.vmem %s9, 56
  %1735 = vst.msk [vmem:[%s1734] sm:$0xff] %vm199, %v1733
  %v1736 = vld [vmem:[%s9] sm:$0xff]
  %v1737 = vld [vmem:[%s9 + $0x8] sm:$0xff]
  %v1738 = vld [vmem:[%s9 + $0x10] sm:$0xff]
  %v1739 = vld [vmem:[%s9 + $0x18] sm:$0xff]
  %v1740 = vld [vmem:[%s9 + $0x20] sm:$0xff]
  %v1741 = vld [vmem:[%s9 + $0x28] sm:$0xff]
  %v1742 = vld [vmem:[%s9 + $0x30] sm:$0xff]
  %v1743 = vld [vmem:[%s9 + $0x38] sm:$0xff]
  %v1744 = vld [vmem:[%s7] sm:$0xff]
  %v1745 = vld [vmem:[%s7 + $0x8] sm:$0xff]
  %v1746 = vld [vmem:[%s7 + $0x10] sm:$0xff]
  %v1747 = vld [vmem:[%s7 + $0x18] sm:$0xff]
  %v1748 = vld [vmem:[%s8] sm:$0x1]
  %v1750 = vlaneseq
  %v1751 = vshrl.u32 %v1750, 7
  %v1752 = vsub.s32 0, %v1751
  %v1753 = vrot.slane %v1748, %v1752
  %v1756 = vsel %vm199, %v1736, 0
  %v1759 = vsel %vm199, %v1737, 0
  %v1762 = vsel %vm199, %v1738, 0
  %v1765 = vsel %vm199, %v1739, 0
  %v1768 = vsel %vm199, %v1740, 0
  %v1771 = vsel %vm199, %v1741, 0
  %v1774 = vsel %vm199, %v1742, 0
  %v1777 = vsel %vm199, %v1743, 0
  %1779 = vmatprep.subr.mxu0 0.0
  %1780 = vmatpush1.msra.mxu0 0.0
  %1781 = vmatprep.subr.mxu0 0.0
  %1782 = vmatpush1.msra.mxu0 0.0
  %1783 = vmatprep.subr.mxu0 0.0
  %1784 = vmatpush1.msra.mxu0 0.0
  %1785 = vmatprep.subr.mxu0 0.0
  %1786 = vmatpush1.msra.mxu0 0.0
  %1787 = vmatprep.subr.mxu0 0.0
  %1788 = vmatpush1.msra.mxu0 0.0
  %1789 = vmatprep.subr.mxu0 0.0
  %1790 = vmatpush1.msra.mxu0 0.0
  %1791 = vmatprep.subr.mxu0 0.0
  %1792 = vmatpush1.msra.mxu0 0.0
  %1793 = vmatprep.subr.mxu0 0.0
  %1794 = vmatpush1.msra.mxu0 0.0
  %1795 = vmatprep.subr.mxu0 0.0
  %1796 = vmatpush1.msra.mxu0 0.0
  %1797 = vmatprep.subr.mxu0 0.0
  %1798 = vmatpush1.msra.mxu0 0.0
  %1799 = vmatprep.subr.mxu0 0.0
  %1800 = vmatpush1.msra.mxu0 0.0
  %1801 = vmatprep.subr.mxu0 0.0
  %1802 = vmatpush1.msra.mxu0 0.0
  %1803 = vmatprep.subr.mxu0 0.0
  %1804 = vmatpush1.msra.mxu0 %v1747
  %1805 = vmatprep.subr.mxu0 0.0
  %1806 = vmatpush1.msra.mxu0 %v1746
  %1807 = vmatprep.subr.mxu0 0.0
  %1808 = vmatpush1.msra.mxu0 %v1745
  %1809 = vmatprep.subr.mxu0 0.0
  %1810 = vmatpush1.msra.mxu0 %v1744
  %1811 = vmatprep.subr.mxu0 0.0
  %1812 = vmatpush2.msra.mxu0 0.0
  %1813 = vmatprep.subr.mxu0 0.0
  %1814 = vmatpush2.msra.mxu0 0.0
  %1815 = vmatprep.subr.mxu0 0.0
  %1816 = vmatpush2.msra.mxu0 0.0
  %1817 = vmatprep.subr.mxu0 0.0
  %1818 = vmatpush2.msra.mxu0 0.0
  %1819 = vmatprep.subr.mxu0 0.0
  %1820 = vmatpush2.msra.mxu0 0.0
  %1821 = vmatprep.subr.mxu0 0.0
  %1822 = vmatpush2.msra.mxu0 0.0
  %1823 = vmatprep.subr.mxu0 0.0
  %1824 = vmatpush2.msra.mxu0 0.0
  %1825 = vmatprep.subr.mxu0 0.0
  %1826 = vmatpush2.msra.mxu0 0.0
  %1827 = vmatprep.subr.mxu0 0.0
  %1828 = vmatpush2.msra.mxu0 0.0
  %1829 = vmatprep.subr.mxu0 0.0
  %1830 = vmatpush2.msra.mxu0 0.0
  %1831 = vmatprep.subr.mxu0 0.0
  %1832 = vmatpush2.msra.mxu0 0.0
  %1833 = vmatprep.subr.mxu0 0.0
  %1834 = vmatpush2.msra.mxu0 0.0
  %1835 = vmatprep.subr.mxu0 0.0
  %1836 = vmatpush2.msra.mxu0 0.0
  %1837 = vmatprep.subr.mxu0 0.0
  %1838 = vmatpush2.msra.mxu0 0.0
  %1839 = vmatprep.subr.mxu0 0.0
  %1840 = vmatpush2.msra.mxu0 0.0
  %1841 = vmatprep.subr.mxu0 0.0
  %1842 = vmatpush2.msra.mxu0 0.0
  %1843 = vmatprep.mubr.f32.mxu0 0.0
  %1844 = vmatmul.mubr.f32.gmra.mxu0 %v1756
  %v1845 = vpop.f32.mrf.mxu0
  %v1846 = vadd.f32 %v1753, %v1845
  %v1847 = vpop.f32.mrf.mxu0
  %1848 = vmatprep.mubr.f32.mxu0 0.0
  %1849 = vmatmul.mubr.f32.gmra.mxu0 %v1759
  %v1850 = vpop.f32.mrf.mxu0
  %v1851 = vadd.f32 %v1753, %v1850
  %v1852 = vpop.f32.mrf.mxu0
  %1853 = vmatprep.mubr.f32.mxu0 0.0
  %1854 = vmatmul.mubr.f32.gmra.mxu0 %v1762
  %v1855 = vpop.f32.mrf.mxu0
  %v1856 = vadd.f32 %v1753, %v1855
  %v1857 = vpop.f32.mrf.mxu0
  %1858 = vmatprep.mubr.f32.mxu0 0.0
  %1859 = vmatmul.mubr.f32.gmra.mxu0 %v1765
  %v1860 = vpop.f32.mrf.mxu0
  %v1861 = vadd.f32 %v1753, %v1860
  %v1862 = vpop.f32.mrf.mxu0
  %1863 = vmatprep.mubr.f32.mxu0 0.0
  %1864 = vmatmul.mubr.f32.gmra.mxu0 %v1768
  %v1865 = vpop.f32.mrf.mxu0
  %v1866 = vadd.f32 %v1753, %v1865
  %v1867 = vpop.f32.mrf.mxu0
  %1868 = vmatprep.mubr.f32.mxu0 0.0
  %1869 = vmatmul.mubr.f32.gmra.mxu0 %v1771
  %v1870 = vpop.f32.mrf.mxu0
  %v1871 = vadd.f32 %v1753, %v1870
  %v1872 = vpop.f32.mrf.mxu0
  %1873 = vmatprep.mubr.f32.mxu0 0.0
  %1874 = vmatmul.mubr.f32.gmra.mxu0 %v1774
  %v1875 = vpop.f32.mrf.mxu0
  %v1876 = vadd.f32 %v1753, %v1875
  %v1877 = vpop.f32.mrf.mxu0
  %1878 = vmatprep.mubr.f32.mxu0 0.0
  %1879 = vmatmul.mubr.f32.gmra.mxu0 %v1777
  %v1880 = vpop.f32.mrf.mxu0
  %v1881 = vadd.f32 %v1753, %v1880
  %v1882 = vpop.f32.mrf.mxu0
  %1883 = vdwg.mxu0
  %vm1884 = vcmask 15360
  %1885 = vst.msk [vmem:[%s10] sm:$0xff] %vm1884, %v1846
  %1886 = vst.msk [vmem:[%s10 + $0x8] sm:$0xff] %vm1884, %v1851
  %1887 = vst.msk [vmem:[%s10 + $0x10] sm:$0xff] %vm1884, %v1856
  %1888 = vst.msk [vmem:[%s10 + $0x18] sm:$0xff] %vm1884, %v1861
  %1889 = vst.msk [vmem:[%s10 + $0x20] sm:$0xff] %vm1884, %v1866
  %1890 = vst.msk [vmem:[%s10 + $0x28] sm:$0xff] %vm1884, %v1871
  %1891 = vst.msk [vmem:[%s10 + $0x30] sm:$0xff] %vm1884, %v1876
  %1892 = vst.msk [vmem:[%s10 + $0x38] sm:$0xff] %vm1884, %v1881
  // Predicated region
  $region38: #{tpu_custom_call.1} parent=0 // pred_check
    _
  $region39: #{tpu_custom_call.1} parent=0 // pred_check_branch
    %1894 = sbr.rel (0) target = $region41
  $region40: #{tpu_custom_call.1} parent=0 // pred_region
    _
  $region41: #{tpu_custom_call.1} parent=0 // pred_fallthru
    _
  // Predicated region
  $region42: #{tpu_custom_call.1} parent=0 // pred_check
    _
  $region43: #{tpu_custom_call.1} parent=0 // pred_check_branch
    %1896 = sbr.rel (0) target = $region45
  $region44: #{tpu_custom_call.1} parent=0 // pred_region
    _
  $region45: #{tpu_custom_call.1} parent=0 // pred_fallthru
    _
  // Predicated region
  $region46: #{tpu_custom_call.1} parent=0 // pred_check
    _
  $region47: #{tpu_custom_call.1} parent=0 // pred_check_branch
    %1898 = sbr.rel (0) target = $region49
  $region48: #{tpu_custom_call.1} parent=0 // pred_region
    _
  $region49: #{tpu_custom_call.1} parent=0 // pred_fallthru
    _
  // Predicated region
  $region50: #{tpu_custom_call.1} parent=0 // pred_check
    _
  $region51: #{tpu_custom_call.1} parent=0 // pred_check_branch
    %1900 = sbr.rel (0) target = $region53
  $region52: #{tpu_custom_call.1} parent=0 // pred_region
    _
  $region53: #{tpu_custom_call.1} parent=0 // pred_fallthru
    _

</llo_original>
